<compile_context>
chip_gen: v6e
topology: v6e:2x2x1
jax: 0.10.0
libtpu: 0.0.40
codegen_flags: <defaults>
</compile_context>

<pallas_src>
import functools

import jax
import jax.numpy as jnp
from jax import lax
from jax.experimental import pallas as pl
from jax.experimental.pallas import tpu as pltpu


# ----------------------------- Pallas kernel ------------------------------- #
def _tagger_encoder_kernel(x_ref, w_ih_ref, b_gates_ref, w_hh_ref,
                           w_out_ref, b_out_ref,          # inputs
                           out_ref,                        # output (T*B, KP)
                           gx_ref, h_ref,                  # VMEM scratch
                           *, seq_len, batch, mxu_dtype):
    """Fused encoder: input projection + LSTM recurrence + emission projection.

    x_ref:      (T*B, E)   embeddings, time-major rows (row t*B+b).
    w_ih_ref:   (E, 4H)    input->gates weights (i,f,g,o order, b_ih+b_hh folded).
    b_gates_ref:(1, 4H)
    w_hh_ref:   (H, 4H)    recurrent weights.
    w_out_ref:  (H, KP)    emission weights zero-padded to KP=128 lanes.
    b_out_ref:  (1, KP)
    out_ref:    (T*B, KP)  lane-dense emissions (columns >= K are zero).
    gx_ref:     (T*B, 4H)  scratch: hoisted x @ W_ih + b_gates.
    h_ref:      (T*B, H)   scratch: hidden state for every timestep.
    """
    H = w_hh_ref.shape[0]

    # Hoisted input projection: one MXU pass over all timesteps.
    gx_ref[...] = (
        jnp.dot(x_ref[...].astype(mxu_dtype), w_ih_ref[...].astype(mxu_dtype),
                preferred_element_type=jnp.float32)
        + b_gates_ref[...])

    w_hh = w_hh_ref[...].astype(mxu_dtype)   # hoist the weight load/cast

    def step(t, carry):
        h_prev, c_prev = carry
        row = pl.multiple_of(t * batch, batch)   # aligned sublane start

        # Only the recurrent matmul stays on the serial path.
        gates = gx_ref[pl.ds(row, batch), :] + jnp.dot(
            h_prev.astype(mxu_dtype), w_hh, preferred_element_type=jnp.float32)

        # Full-width nonlinearities over the single (B, 4H=128-lane) tile,
        # then cheap lane slices.  PyTorch nn.LSTM gate order: i, f, g, o.
        # (Gate lane order only worth reshuffling if a bundle dump shows vrot
        #  on the critical path -- XLU is otherwise idle here.)
        sig = jax.nn.sigmoid(gates)
        tnh = jnp.tanh(gates)
        i_g = sig[:, 0 * H:1 * H]
        f_g = sig[:, 1 * H:2 * H]
        g_g = tnh[:, 2 * H:3 * H]
        o_g = sig[:, 3 * H:4 * H]

        c_new = f_g * c_prev + i_g * g_g
        h_new = o_g * jnp.tanh(c_new)

        h_ref[pl.ds(row, batch), :] = h_new      # VMEM scratch, not HBM
        return h_new, c_new

    h0 = jnp.zeros((batch, H), jnp.float32)
    c0 = jnp.zeros((batch, H), jnp.float32)
    # T is small and static -> fully unroll so the LLO scheduler sees the
    # dependence chain.  Cap the unroll factor once T grows large.
    lax.fori_loop(0, seq_len, step, (h0, c0), unroll=True)

    # Hoisted emission projection: one MXU pass, lane-dense (T*B, 128) store.
    out_ref[...] = (
        jnp.dot(h_ref[...].astype(mxu_dtype), w_out_ref[...].astype(mxu_dtype),
                preferred_element_type=jnp.float32)
        + b_out_ref[...])


def tagger_encoder_pallas(x_tbe, w_ih, b_gates, w_hh, w_out, b_out,
                          *, mxu_dtype=jnp.float32):
    """x_tbe: (T, B, E) f32 -> emissions (T, B, K) f32, one kernel launch."""
    T, B, E = x_tbe.shape
    H = w_hh.shape[0]
    K = w_out.shape[1]
    KP = 128  # lane-dense padded emission width

    # Zero-pad the emission projection to 128 output lanes so the kernel's
    # only HBM writeback is an unmasked, lane-dense store.
    w_out_pad = jnp.zeros((H, KP), jnp.float32).at[:, :K].set(w_out)
    b_out_pad = jnp.zeros((1, KP), jnp.float32).at[:, :K].set(b_out)

    x2 = x_tbe.reshape(T * B, E)

    kernel = functools.partial(_tagger_encoder_kernel,
                               seq_len=T, batch=B, mxu_dtype=mxu_dtype)

    out = pl.pallas_call(
        kernel,
        out_shape=jax.ShapeDtypeStruct((T * B, KP), jnp.float32),
        # No grid: everything (a few tens of KiB) lives in VMEM for one
        # invocation.  At larger T/B/H switch to a T-chunked grid and set
        # pltpu.CompilerParams(vmem_limit_bytes=...) (v5e scoped default is
        # 16 MiB; v7x physical VMEM is 64 MiB).
        in_specs=[
            pl.BlockSpec(memory_space=pltpu.MemorySpace.VMEM),  # x2
            pl.BlockSpec(memory_space=pltpu.MemorySpace.VMEM),  # w_ih
            pl.BlockSpec(memory_space=pltpu.MemorySpace.VMEM),  # b_gates
            pl.BlockSpec(memory_space=pltpu.MemorySpace.VMEM),  # w_hh
            pl.BlockSpec(memory_space=pltpu.MemorySpace.VMEM),  # w_out_pad
            pl.BlockSpec(memory_space=pltpu.MemorySpace.VMEM),  # b_out_pad
        ],
        out_specs=pl.BlockSpec(memory_space=pltpu.MemorySpace.VMEM),
        scratch_shapes=[
            pltpu.VMEM((T * B, 4 * H), jnp.float32),  # gates_x
            pltpu.VMEM((T * B, H), jnp.float32),      # h_all
        ],
    )(x2, w_ih, b_gates, w_hh, w_out_pad, b_out_pad)

    return out.reshape(T, B, KP)[:, :, :K]             # (T, B, K)


# ------------------------------ Tagger wrapper ------------------------------ #
def tagger_forward(params, word_ids, char_ids, *, mxu_dtype=jnp.float32):
    """Forward pass of Tagger: embedding_layer -> encoder_layer (emissions)."""
    # Embedding layer (glue: gathers + mean pool + concat).
    word_emb = params["word_table"][word_ids]                 # (B, T, Dw)
    char_emb = params["char_table"][char_ids].mean(axis=2)    # (B, T, Dc)
    x = jnp.concatenate([word_emb, char_emb], axis=-1)        # (B, T, E)

    # Time-major for the recurrence.
    x_tbe = jnp.transpose(x, (1, 0, 2)).astype(jnp.float32)   # (T, B, E)

    # Fused input projection + recurrence + emission projection: ONE launch.
    emit = tagger_encoder_pallas(
        x_tbe, params["w_ih"], params["b_gates"], params["w_hh"],
        params["w_out"], params["b_out"], mxu_dtype=mxu_dtype)  # (T, B, K)

    return jnp.transpose(emit, (1, 0, 2))                     # (B, T, K)


# ------------------------------ Pure-JAX reference -------------------------- #
def tagger_reference(params, word_ids, char_ids):
    word_emb = params["word_table"][word_ids]
    char_emb = params["char_table"][char_ids].mean(axis=2)
    x = jnp.concatenate([word_emb, char_emb], axis=-1).astype(jnp.float32)
    x_tbe = jnp.transpose(x, (1, 0, 2))
    B = x_tbe.shape[1]
    H = params["w_hh"].shape[0]

    def step(carry, x_t):
        h, c = carry
        gates = x_t @ params["w_ih"] + h @ params["w_hh"] + params["b_gates"][0]
        i_g = jax.nn.sigmoid(gates[:, 0 * H:1 * H])
        f_g = jax.nn.sigmoid(gates[:, 1 * H:2 * H])
        g_g = jnp.tanh(gates[:, 2 * H:3 * H])
        o_g = jax.nn.sigmoid(gates[:, 3 * H:4 * H])
        c = f_g * c + i_g * g_g
        h = o_g * jnp.tanh(c)
        emit = h @ params["w_out"] + params["b_out"][0]
        return (h, c), emit

    init = (jnp.zeros((B, H), jnp.float32), jnp.zeros((B, H), jnp.float32))
    _, emits = lax.scan(step, init, x_tbe)
    return jnp.transpose(emits, (1, 0, 2))


# ----------------------------------- main ----------------------------------- #
if __name__ == "__main__":
    # Small shapes consistent with the module's __init__ arguments.
    B, T = 8, 8                     # batch, sequence length
    CTX_DIM = 32                    # ctx_dim -> word embedding dim
    CHAR_DIM = 16                   # char embedding dim (mean-pooled)
    E = CTX_DIM + CHAR_DIM          # embedding_layer.embedding_dim
    H = 32                          # encoder hidden size (4H = 128 lanes)
    NUM_CHUNKS = 2
    NUM_TAGS = 5                    # |tag_vocab|
    K = NUM_CHUNKS * NUM_TAGS       # emission dim
    WORD_VOCAB = 50
    CHAR_VOCAB = 30
    CHARS_PER_WORD = 4

    key = jax.random.PRNGKey(0)
    ks = jax.random.split(key, 10)

    params = {
        "word_table": 0.1 * jax.random.normal(ks[0], (WORD_VOCAB, CTX_DIM), jnp.float32),
        "char_table": 0.1 * jax.random.normal(ks[1], (CHAR_VOCAB, CHAR_DIM), jnp.float32),
        # PyTorch nn.LSTM weights pre-transposed to (in, 4H)/(H, 4H), i,f,g,o
        # order, with b_ih + b_hh pre-summed into b_gates.
        "w_ih": 0.1 * jax.random.normal(ks[2], (E, 4 * H), jnp.float32),
        "w_hh": 0.1 * jax.random.normal(ks[3], (H, 4 * H), jnp.float32),
        "b_gates": 0.1 * jax.random.normal(ks[4], (1, 4 * H), jnp.float32),
        "w_out": 0.1 * jax.random.normal(ks[5], (H, K), jnp.float32),
        "b_out": 0.1 * jax.random.normal(ks[6], (1, K), jnp.float32),
    }

    word_ids = jax.random.randint(ks[7], (B, T), 0, WORD_VOCAB)
    char_ids = jax.random.randint(ks[8], (B, T, CHARS_PER_WORD), 0, CHAR_VOCAB)

    # Default mxu_dtype=f32 matches the f32 reference; use jnp.bfloat16 on
    # v6e/v7x at scale (re-validate tolerance when doing so).
    emissions = jax.block_until_ready(tagger_forward(params, word_ids, char_ids))
    ref = jax.block_until_ready(tagger_reference(params, word_ids, char_ids))

    assert emissions.shape == (B, T, K), emissions.shape
    assert jnp.allclose(emissions, ref, atol=1e-3, rtol=1e-3), \
        float(jnp.max(jnp.abs(emissions - ref)))

    print("KERNEL_OK")
</pallas_src>

<mosaic_0001>
module attributes {stable_mosaic.version = 11 : i64} {
  func.func @_tagger_encoder_kernel(%arg0: memref<64x48xf32, #tpu.memory_space<vmem>>, %arg1: memref<48x128xf32, #tpu.memory_space<vmem>>, %arg2: memref<1x128xf32, #tpu.memory_space<vmem>>, %arg3: memref<32x128xf32, #tpu.memory_space<vmem>>, %arg4: memref<32x128xf32, #tpu.memory_space<vmem>>, %arg5: memref<1x128xf32, #tpu.memory_space<vmem>>, %arg6: memref<64x128xf32, #tpu.memory_space<vmem>>, %arg7: memref<64x128xf32, #tpu.memory_space<vmem>>, %arg8: memref<64x32xf32, #tpu.memory_space<vmem>>) attributes {dimension_semantics = [], scalar_prefetch = 0 : i64, scratch_operands = 2 : i64, tpu.core_type = #tpu.core_type<tc>} {
    %c0 = arith.constant 0 : index
    %c0_0 = arith.constant 0 : index
    %0 = vector.load %arg0[%c0, %c0_0] : memref<64x48xf32, #tpu.memory_space<vmem>>, vector<64x48xf32>
    %c0_1 = arith.constant 0 : index
    %c0_2 = arith.constant 0 : index
    %1 = vector.load %arg1[%c0_1, %c0_2] : memref<48x128xf32, #tpu.memory_space<vmem>>, vector<48x128xf32>
    %cst = arith.constant dense<0.000000e+00> : vector<64x128xf32>
    %2 = tpu.matmul %0, %1, %cst {dimension_numbers = #tpu.dot_dimension_numbers<[1], [0], [0], [1], [0, 0, 1, 1], [], []>} : vector<64x48xf32>, vector<48x128xf32>, vector<64x128xf32> -> vector<64x128xf32>
    %c0_3 = arith.constant 0 : index
    %c0_4 = arith.constant 0 : index
    %3 = vector.load %arg2[%c0_3, %c0_4] : memref<1x128xf32, #tpu.memory_space<vmem>>, vector<1x128xf32>
    %4 = vector.broadcast %3 : vector<1x128xf32> to vector<64x128xf32>
    %5 = arith.addf %2, %4 : vector<64x128xf32>
    %c0_5 = arith.constant 0 : index
    %c0_6 = arith.constant 0 : index
    %6 = vector.load %arg7[%c0_5, %c0_6] : memref<64x128xf32, #tpu.memory_space<vmem>>, vector<64x128xf32>
    tpu.vector_store %arg7[%c0_5, %c0_6], %5 {strides = array<i32>} : memref<64x128xf32, #tpu.memory_space<vmem>>, vector<64x128xf32>,
    %c0_7 = arith.constant 0 : index
    %c0_8 = arith.constant 0 : index
    %7 = vector.load %arg3[%c0_7, %c0_8] : memref<32x128xf32, #tpu.memory_space<vmem>>, vector<32x128xf32>
    %cst_9 = arith.constant 0.000000e+00 : f32
    %8 = vector.broadcast %cst_9 : f32 to vector<8x32xf32>
    %cst_10 = arith.constant 0.000000e+00 : f32
    %9 = vector.broadcast %cst_10 : f32 to vector<8x32xf32>
    %c0_i32 = arith.constant 0 : i32
    %c8_i32 = arith.constant 8 : i32
    %10 = arith.muli %c0_i32, %c8_i32 : i32
    %11 = tpu.assume_multiple %10, 8 : i32
    %12 = arith.index_cast %11 : i32 to index
    %c0_11 = arith.constant 0 : index
    %13 = vector.load %arg7[%12, %c0_11] : memref<64x128xf32, #tpu.memory_space<vmem>>, vector<8x128xf32>
    %cst_12 = arith.constant dense<0.000000e+00> : vector<8x128xf32>
    %14 = tpu.matmul %8, %7, %cst_12 {dimension_numbers = #tpu.dot_dimension_numbers<[1], [0], [0], [1], [0, 0, 1, 1], [], []>} : vector<8x32xf32>, vector<32x128xf32>, vector<8x128xf32> -> vector<8x128xf32>
    %15 = arith.addf %13, %14 : vector<8x128xf32>
    %16 = arith.negf %15 : vector<8x128xf32>
    %17 = math.exp %16 : vector<8x128xf32>
    %cst_13 = arith.constant 1.000000e+00 : f32
    %18 = vector.broadcast %cst_13 : f32 to vector<8x128xf32>
    %19 = arith.addf %18, %17 : vector<8x128xf32>
    %20 = arith.divf %18, %19 : vector<8x128xf32>
    %21 = math.tanh %15 : vector<8x128xf32>
    %22 = vector.extract_strided_slice %20 {offsets = [0, 0], sizes = [8, 32], strides = [1, 1]} : vector<8x128xf32> to vector<8x32xf32>
    %23 = vector.extract_strided_slice %20 {offsets = [0, 32], sizes = [8, 32], strides = [1, 1]} : vector<8x128xf32> to vector<8x32xf32>
    %24 = vector.extract_strided_slice %21 {offsets = [0, 64], sizes = [8, 32], strides = [1, 1]} : vector<8x128xf32> to vector<8x32xf32>
    %25 = vector.extract_strided_slice %20 {offsets = [0, 96], sizes = [8, 32], strides = [1, 1]} : vector<8x128xf32> to vector<8x32xf32>
    %26 = arith.mulf %23, %9 : vector<8x32xf32>
    %27 = arith.mulf %22, %24 : vector<8x32xf32>
    %28 = arith.addf %26, %27 : vector<8x32xf32>
    %29 = math.tanh %28 : vector<8x32xf32>
    %30 = arith.mulf %25, %29 : vector<8x32xf32>
    %31 = arith.index_cast %11 : i32 to index
    %c0_14 = arith.constant 0 : index
    %32 = vector.load %arg8[%31, %c0_14] : memref<64x32xf32, #tpu.memory_space<vmem>>, vector<8x32xf32>
    tpu.vector_store %arg8[%31, %c0_14], %30 {strides = array<i32>} : memref<64x32xf32, #tpu.memory_space<vmem>>, vector<8x32xf32>,
    %c1_i32 = arith.constant 1 : i32
    %c8_i32_15 = arith.constant 8 : i32
    %33 = arith.muli %c1_i32, %c8_i32_15 : i32
    %34 = tpu.assume_multiple %33, 8 : i32
    %35 = arith.index_cast %34 : i32 to index
    %c0_16 = arith.constant 0 : index
    %36 = vector.load %arg7[%35, %c0_16] : memref<64x128xf32, #tpu.memory_space<vmem>>, vector<8x128xf32>
    %cst_17 = arith.constant dense<0.000000e+00> : vector<8x128xf32>
    %37 = tpu.matmul %30, %7, %cst_17 {dimension_numbers = #tpu.dot_dimension_numbers<[1], [0], [0], [1], [0, 0, 1, 1], [], []>} : vector<8x32xf32>, vector<32x128xf32>, vector<8x128xf32> -> vector<8x128xf32>
    %38 = arith.addf %36, %37 : vector<8x128xf32>
    %39 = arith.negf %38 : vector<8x128xf32>
    %40 = math.exp %39 : vector<8x128xf32>
    %cst_18 = arith.constant 1.000000e+00 : f32
    %41 = vector.broadcast %cst_18 : f32 to vector<8x128xf32>
    %42 = arith.addf %41, %40 : vector<8x128xf32>
    %43 = arith.divf %41, %42 : vector<8x128xf32>
    %44 = math.tanh %38 : vector<8x128xf32>
    %45 = vector.extract_strided_slice %43 {offsets = [0, 0], sizes = [8, 32], strides = [1, 1]} : vector<8x128xf32> to vector<8x32xf32>
    %46 = vector.extract_strided_slice %43 {offsets = [0, 32], sizes = [8, 32], strides = [1, 1]} : vector<8x128xf32> to vector<8x32xf32>
    %47 = vector.extract_strided_slice %44 {offsets = [0, 64], sizes = [8, 32], strides = [1, 1]} : vector<8x128xf32> to vector<8x32xf32>
    %48 = vector.extract_strided_slice %43 {offsets = [0, 96], sizes = [8, 32], strides = [1, 1]} : vector<8x128xf32> to vector<8x32xf32>
    %49 = arith.mulf %46, %28 : vector<8x32xf32>
    %50 = arith.mulf %45, %47 : vector<8x32xf32>
    %51 = arith.addf %49, %50 : vector<8x32xf32>
    %52 = math.tanh %51 : vector<8x32xf32>
    %53 = arith.mulf %48, %52 : vector<8x32xf32>
    %54 = arith.index_cast %34 : i32 to index
    %c0_19 = arith.constant 0 : index
    %55 = vector.load %arg8[%54, %c0_19] : memref<64x32xf32, #tpu.memory_space<vmem>>, vector<8x32xf32>
    tpu.vector_store %arg8[%54, %c0_19], %53 {strides = array<i32>} : memref<64x32xf32, #tpu.memory_space<vmem>>, vector<8x32xf32>,
    %c2_i32 = arith.constant 2 : i32
    %c8_i32_20 = arith.constant 8 : i32
    %56 = arith.muli %c2_i32, %c8_i32_20 : i32
    %57 = tpu.assume_multiple %56, 8 : i32
    %58 = arith.index_cast %57 : i32 to index
    %c0_21 = arith.constant 0 : index
    %59 = vector.load %arg7[%58, %c0_21] : memref<64x128xf32, #tpu.memory_space<vmem>>, vector<8x128xf32>
    %cst_22 = arith.constant dense<0.000000e+00> : vector<8x128xf32>
    %60 = tpu.matmul %53, %7, %cst_22 {dimension_numbers = #tpu.dot_dimension_numbers<[1], [0], [0], [1], [0, 0, 1, 1], [], []>} : vector<8x32xf32>, vector<32x128xf32>, vector<8x128xf32> -> vector<8x128xf32>
    %61 = arith.addf %59, %60 : vector<8x128xf32>
    %62 = arith.negf %61 : vector<8x128xf32>
    %63 = math.exp %62 : vector<8x128xf32>
    %cst_23 = arith.constant 1.000000e+00 : f32
    %64 = vector.broadcast %cst_23 : f32 to vector<8x128xf32>
    %65 = arith.addf %64, %63 : vector<8x128xf32>
    %66 = arith.divf %64, %65 : vector<8x128xf32>
    %67 = math.tanh %61 : vector<8x128xf32>
    %68 = vector.extract_strided_slice %66 {offsets = [0, 0], sizes = [8, 32], strides = [1, 1]} : vector<8x128xf32> to vector<8x32xf32>
    %69 = vector.extract_strided_slice %66 {offsets = [0, 32], sizes = [8, 32], strides = [1, 1]} : vector<8x128xf32> to vector<8x32xf32>
    %70 = vector.extract_strided_slice %67 {offsets = [0, 64], sizes = [8, 32], strides = [1, 1]} : vector<8x128xf32> to vector<8x32xf32>
    %71 = vector.extract_strided_slice %66 {offsets = [0, 96], sizes = [8, 32], strides = [1, 1]} : vector<8x128xf32> to vector<8x32xf32>
    %72 = arith.mulf %69, %51 : vector<8x32xf32>
    %73 = arith.mulf %68, %70 : vector<8x32xf32>
    %74 = arith.addf %72, %73 : vector<8x32xf32>
    %75 = math.tanh %74 : vector<8x32xf32>
    %76 = arith.mulf %71, %75 : vector<8x32xf32>
    %77 = arith.index_cast %57 : i32 to index
    %c0_24 = arith.constant 0 : index
    %78 = vector.load %arg8[%77, %c0_24] : memref<64x32xf32, #tpu.memory_space<vmem>>, vector<8x32xf32>
    tpu.vector_store %arg8[%77, %c0_24], %76 {strides = array<i32>} : memref<64x32xf32, #tpu.memory_space<vmem>>, vector<8x32xf32>,
    %c3_i32 = arith.constant 3 : i32
    %c8_i32_25 = arith.constant 8 : i32
    %79 = arith.muli %c3_i32, %c8_i32_25 : i32
    %80 = tpu.assume_multiple %79, 8 : i32
    %81 = arith.index_cast %80 : i32 to index
    %c0_26 = arith.constant 0 : index
    %82 = vector.load %arg7[%81, %c0_26] : memref<64x128xf32, #tpu.memory_space<vmem>>, vector<8x128xf32>
    %cst_27 = arith.constant dense<0.000000e+00> : vector<8x128xf32>
    %83 = tpu.matmul %76, %7, %cst_27 {dimension_numbers = #tpu.dot_dimension_numbers<[1], [0], [0], [1], [0, 0, 1, 1], [], []>} : vector<8x32xf32>, vector<32x128xf32>, vector<8x128xf32> -> vector<8x128xf32>
    %84 = arith.addf %82, %83 : vector<8x128xf32>
    %85 = arith.negf %84 : vector<8x128xf32>
    %86 = math.exp %85 : vector<8x128xf32>
    %cst_28 = arith.constant 1.000000e+00 : f32
    %87 = vector.broadcast %cst_28 : f32 to vector<8x128xf32>
    %88 = arith.addf %87, %86 : vector<8x128xf32>
    %89 = arith.divf %87, %88 : vector<8x128xf32>
    %90 = math.tanh %84 : vector<8x128xf32>
    %91 = vector.extract_strided_slice %89 {offsets = [0, 0], sizes = [8, 32], strides = [1, 1]} : vector<8x128xf32> to vector<8x32xf32>
    %92 = vector.extract_strided_slice %89 {offsets = [0, 32], sizes = [8, 32], strides = [1, 1]} : vector<8x128xf32> to vector<8x32xf32>
    %93 = vector.extract_strided_slice %90 {offsets = [0, 64], sizes = [8, 32], strides = [1, 1]} : vector<8x128xf32> to vector<8x32xf32>
    %94 = vector.extract_strided_slice %89 {offsets = [0, 96], sizes = [8, 32], strides = [1, 1]} : vector<8x128xf32> to vector<8x32xf32>
    %95 = arith.mulf %92, %74 : vector<8x32xf32>
    %96 = arith.mulf %91, %93 : vector<8x32xf32>
    %97 = arith.addf %95, %96 : vector<8x32xf32>
    %98 = math.tanh %97 : vector<8x32xf32>
    %99 = arith.mulf %94, %98 : vector<8x32xf32>
    %100 = arith.index_cast %80 : i32 to index
    %c0_29 = arith.constant 0 : index
    %101 = vector.load %arg8[%100, %c0_29] : memref<64x32xf32, #tpu.memory_space<vmem>>, vector<8x32xf32>
    tpu.vector_store %arg8[%100, %c0_29], %99 {strides = array<i32>} : memref<64x32xf32, #tpu.memory_space<vmem>>, vector<8x32xf32>,
    %c4_i32 = arith.constant 4 : i32
    %c8_i32_30 = arith.constant 8 : i32
    %102 = arith.muli %c4_i32, %c8_i32_30 : i32
    %103 = tpu.assume_multiple %102, 8 : i32
    %104 = arith.index_cast %103 : i32 to index
    %c0_31 = arith.constant 0 : index
    %105 = vector.load %arg7[%104, %c0_31] : memref<64x128xf32, #tpu.memory_space<vmem>>, vector<8x128xf32>
    %cst_32 = arith.constant dense<0.000000e+00> : vector<8x128xf32>
    %106 = tpu.matmul %99, %7, %cst_32 {dimension_numbers = #tpu.dot_dimension_numbers<[1], [0], [0], [1], [0, 0, 1, 1], [], []>} : vector<8x32xf32>, vector<32x128xf32>, vector<8x128xf32> -> vector<8x128xf32>
    %107 = arith.addf %105, %106 : vector<8x128xf32>
    %108 = arith.negf %107 : vector<8x128xf32>
    %109 = math.exp %108 : vector<8x128xf32>
    %cst_33 = arith.constant 1.000000e+00 : f32
    %110 = vector.broadcast %cst_33 : f32 to vector<8x128xf32>
    %111 = arith.addf %110, %109 : vector<8x128xf32>
    %112 = arith.divf %110, %111 : vector<8x128xf32>
    %113 = math.tanh %107 : vector<8x128xf32>
    %114 = vector.extract_strided_slice %112 {offsets = [0, 0], sizes = [8, 32], strides = [1, 1]} : vector<8x128xf32> to vector<8x32xf32>
    %115 = vector.extract_strided_slice %112 {offsets = [0, 32], sizes = [8, 32], strides = [1, 1]} : vector<8x128xf32> to vector<8x32xf32>
    %116 = vector.extract_strided_slice %113 {offsets = [0, 64], sizes = [8, 32], strides = [1, 1]} : vector<8x128xf32> to vector<8x32xf32>
    %117 = vector.extract_strided_slice %112 {offsets = [0, 96], sizes = [8, 32], strides = [1, 1]} : vector<8x128xf32> to vector<8x32xf32>
    %118 = arith.mulf %115, %97 : vector<8x32xf32>
    %119 = arith.mulf %114, %116 : vector<8x32xf32>
    %120 = arith.addf %118, %119 : vector<8x32xf32>
    %121 = math.tanh %120 : vector<8x32xf32>
    %122 = arith.mulf %117, %121 : vector<8x32xf32>
    %123 = arith.index_cast %103 : i32 to index
    %c0_34 = arith.constant 0 : index
    %124 = vector.load %arg8[%123, %c0_34] : memref<64x32xf32, #tpu.memory_space<vmem>>, vector<8x32xf32>
    tpu.vector_store %arg8[%123, %c0_34], %122 {strides = array<i32>} : memref<64x32xf32, #tpu.memory_space<vmem>>, vector<8x32xf32>,
    %c5_i32 = arith.constant 5 : i32
    %c8_i32_35 = arith.constant 8 : i32
    %125 = arith.muli %c5_i32, %c8_i32_35 : i32
    %126 = tpu.assume_multiple %125, 8 : i32
    %127 = arith.index_cast %126 : i32 to index
    %c0_36 = arith.constant 0 : index
    %128 = vector.load %arg7[%127, %c0_36] : memref<64x128xf32, #tpu.memory_space<vmem>>, vector<8x128xf32>
    %cst_37 = arith.constant dense<0.000000e+00> : vector<8x128xf32>
    %129 = tpu.matmul %122, %7, %cst_37 {dimension_numbers = #tpu.dot_dimension_numbers<[1], [0], [0], [1], [0, 0, 1, 1], [], []>} : vector<8x32xf32>, vector<32x128xf32>, vector<8x128xf32> -> vector<8x128xf32>
    %130 = arith.addf %128, %129 : vector<8x128xf32>
    %131 = arith.negf %130 : vector<8x128xf32>
    %132 = math.exp %131 : vector<8x128xf32>
    %cst_38 = arith.constant 1.000000e+00 : f32
    %133 = vector.broadcast %cst_38 : f32 to vector<8x128xf32>
    %134 = arith.addf %133, %132 : vector<8x128xf32>
    %135 = arith.divf %133, %134 : vector<8x128xf32>
    %136 = math.tanh %130 : vector<8x128xf32>
    %137 = vector.extract_strided_slice %135 {offsets = [0, 0], sizes = [8, 32], strides = [1, 1]} : vector<8x128xf32> to vector<8x32xf32>
    %138 = vector.extract_strided_slice %135 {offsets = [0, 32], sizes = [8, 32], strides = [1, 1]} : vector<8x128xf32> to vector<8x32xf32>
    %139 = vector.extract_strided_slice %136 {offsets = [0, 64], sizes = [8, 32], strides = [1, 1]} : vector<8x128xf32> to vector<8x32xf32>
    %140 = vector.extract_strided_slice %135 {offsets = [0, 96], sizes = [8, 32], strides = [1, 1]} : vector<8x128xf32> to vector<8x32xf32>
    %141 = arith.mulf %138, %120 : vector<8x32xf32>
    %142 = arith.mulf %137, %139 : vector<8x32xf32>
    %143 = arith.addf %141, %142 : vector<8x32xf32>
    %144 = math.tanh %143 : vector<8x32xf32>
    %145 = arith.mulf %140, %144 : vector<8x32xf32>
    %146 = arith.index_cast %126 : i32 to index
    %c0_39 = arith.constant 0 : index
    %147 = vector.load %arg8[%146, %c0_39] : memref<64x32xf32, #tpu.memory_space<vmem>>, vector<8x32xf32>
    tpu.vector_store %arg8[%146, %c0_39], %145 {strides = array<i32>} : memref<64x32xf32, #tpu.memory_space<vmem>>, vector<8x32xf32>,
    %c6_i32 = arith.constant 6 : i32
    %c8_i32_40 = arith.constant 8 : i32
    %148 = arith.muli %c6_i32, %c8_i32_40 : i32
    %149 = tpu.assume_multiple %148, 8 : i32
    %150 = arith.index_cast %149 : i32 to index
    %c0_41 = arith.constant 0 : index
    %151 = vector.load %arg7[%150, %c0_41] : memref<64x128xf32, #tpu.memory_space<vmem>>, vector<8x128xf32>
    %cst_42 = arith.constant dense<0.000000e+00> : vector<8x128xf32>
    %152 = tpu.matmul %145, %7, %cst_42 {dimension_numbers = #tpu.dot_dimension_numbers<[1], [0], [0], [1], [0, 0, 1, 1], [], []>} : vector<8x32xf32>, vector<32x128xf32>, vector<8x128xf32> -> vector<8x128xf32>
    %153 = arith.addf %151, %152 : vector<8x128xf32>
    %154 = arith.negf %153 : vector<8x128xf32>
    %155 = math.exp %154 : vector<8x128xf32>
    %cst_43 = arith.constant 1.000000e+00 : f32
    %156 = vector.broadcast %cst_43 : f32 to vector<8x128xf32>
    %157 = arith.addf %156, %155 : vector<8x128xf32>
    %158 = arith.divf %156, %157 : vector<8x128xf32>
    %159 = math.tanh %153 : vector<8x128xf32>
    %160 = vector.extract_strided_slice %158 {offsets = [0, 0], sizes = [8, 32], strides = [1, 1]} : vector<8x128xf32> to vector<8x32xf32>
    %161 = vector.extract_strided_slice %158 {offsets = [0, 32], sizes = [8, 32], strides = [1, 1]} : vector<8x128xf32> to vector<8x32xf32>
    %162 = vector.extract_strided_slice %159 {offsets = [0, 64], sizes = [8, 32], strides = [1, 1]} : vector<8x128xf32> to vector<8x32xf32>
    %163 = vector.extract_strided_slice %158 {offsets = [0, 96], sizes = [8, 32], strides = [1, 1]} : vector<8x128xf32> to vector<8x32xf32>
    %164 = arith.mulf %161, %143 : vector<8x32xf32>
    %165 = arith.mulf %160, %162 : vector<8x32xf32>
    %166 = arith.addf %164, %165 : vector<8x32xf32>
    %167 = math.tanh %166 : vector<8x32xf32>
    %168 = arith.mulf %163, %167 : vector<8x32xf32>
    %169 = arith.index_cast %149 : i32 to index
    %c0_44 = arith.constant 0 : index
    %170 = vector.load %arg8[%169, %c0_44] : memref<64x32xf32, #tpu.memory_space<vmem>>, vector<8x32xf32>
    tpu.vector_store %arg8[%169, %c0_44], %168 {strides = array<i32>} : memref<64x32xf32, #tpu.memory_space<vmem>>, vector<8x32xf32>,
    %c7_i32 = arith.constant 7 : i32
    %c8_i32_45 = arith.constant 8 : i32
    %171 = arith.muli %c7_i32, %c8_i32_45 : i32
    %172 = tpu.assume_multiple %171, 8 : i32
    %173 = arith.index_cast %172 : i32 to index
    %c0_46 = arith.constant 0 : index
    %174 = vector.load %arg7[%173, %c0_46] : memref<64x128xf32, #tpu.memory_space<vmem>>, vector<8x128xf32>
    %cst_47 = arith.constant dense<0.000000e+00> : vector<8x128xf32>
    %175 = tpu.matmul %168, %7, %cst_47 {dimension_numbers = #tpu.dot_dimension_numbers<[1], [0], [0], [1], [0, 0, 1, 1], [], []>} : vector<8x32xf32>, vector<32x128xf32>, vector<8x128xf32> -> vector<8x128xf32>
    %176 = arith.addf %174, %175 : vector<8x128xf32>
    %177 = arith.negf %176 : vector<8x128xf32>
    %178 = math.exp %177 : vector<8x128xf32>
    %cst_48 = arith.constant 1.000000e+00 : f32
    %179 = vector.broadcast %cst_48 : f32 to vector<8x128xf32>
    %180 = arith.addf %179, %178 : vector<8x128xf32>
    %181 = arith.divf %179, %180 : vector<8x128xf32>
    %182 = math.tanh %176 : vector<8x128xf32>
    %183 = vector.extract_strided_slice %181 {offsets = [0, 0], sizes = [8, 32], strides = [1, 1]} : vector<8x128xf32> to vector<8x32xf32>
    %184 = vector.extract_strided_slice %181 {offsets = [0, 32], sizes = [8, 32], strides = [1, 1]} : vector<8x128xf32> to vector<8x32xf32>
    %185 = vector.extract_strided_slice %182 {offsets = [0, 64], sizes = [8, 32], strides = [1, 1]} : vector<8x128xf32> to vector<8x32xf32>
    %186 = vector.extract_strided_slice %181 {offsets = [0, 96], sizes = [8, 32], strides = [1, 1]} : vector<8x128xf32> to vector<8x32xf32>
    %187 = arith.mulf %184, %166 : vector<8x32xf32>
    %188 = arith.mulf %183, %185 : vector<8x32xf32>
    %189 = arith.addf %187, %188 : vector<8x32xf32>
    %190 = math.tanh %189 : vector<8x32xf32>
    %191 = arith.mulf %186, %190 : vector<8x32xf32>
    %192 = arith.index_cast %172 : i32 to index
    %c0_49 = arith.constant 0 : index
    %193 = vector.load %arg8[%192, %c0_49] : memref<64x32xf32, #tpu.memory_space<vmem>>, vector<8x32xf32>
    tpu.vector_store %arg8[%192, %c0_49], %191 {strides = array<i32>} : memref<64x32xf32, #tpu.memory_space<vmem>>, vector<8x32xf32>,
    %c8_i32_50 = arith.constant 8 : i32
    %c0_51 = arith.constant 0 : index
    %c0_52 = arith.constant 0 : index
    %194 = vector.load %arg8[%c0_51, %c0_52] : memref<64x32xf32, #tpu.memory_space<vmem>>, vector<64x32xf32>
    %c0_53 = arith.constant 0 : index
    %c0_54 = arith.constant 0 : index
    %195 = vector.load %arg4[%c0_53, %c0_54] : memref<32x128xf32, #tpu.memory_space<vmem>>, vector<32x128xf32>
    %cst_55 = arith.constant dense<0.000000e+00> : vector<64x128xf32>
    %196 = tpu.matmul %194, %195, %cst_55 {dimension_numbers = #tpu.dot_dimension_numbers<[1], [0], [0], [1], [0, 0, 1, 1], [], []>} : vector<64x32xf32>, vector<32x128xf32>, vector<64x128xf32> -> vector<64x128xf32>
    %c0_56 = arith.constant 0 : index
    %c0_57 = arith.constant 0 : index
    %197 = vector.load %arg5[%c0_56, %c0_57] : memref<1x128xf32, #tpu.memory_space<vmem>>, vector<1x128xf32>
    %198 = vector.broadcast %197 : vector<1x128xf32> to vector<64x128xf32>
    %199 = arith.addf %196, %198 : vector<64x128xf32>
    %c0_58 = arith.constant 0 : index
    %c0_59 = arith.constant 0 : index
    %200 = vector.load %arg6[%c0_58, %c0_59] : memref<64x128xf32, #tpu.memory_space<vmem>>, vector<64x128xf32>
    tpu.vector_store %arg6[%c0_58, %c0_59], %199 {strides = array<i32>} : memref<64x128xf32, #tpu.memory_space<vmem>>, vector<64x128xf32>,
    return
  }
}

</mosaic_0001>

<llo_original>
// kernel: tpu_custom_call.1
$region0: #{tpu_custom_call.1}
  #allocation0 [shape = 'u32[]', space=smem, size = 0x4, offset = 0x4, fixed_abs, tag = 'smem constant byte address 0x4 - core index']
  #allocation1 [shape = 'u32[144,128]{1,0:T(1,128)}', space=vmem, size = 0x12000, scoped, tag = 'internal scratch']
  #allocation2 [shape = 'f32[64,128]{1,0:T(8,128)}', space=vmem, size = 0x8000, scoped, tag = 'scratch operand']
  #allocation3 [shape = 'f32[64,32]{1,0:T(8,128)}', space=vmem, size = 0x8000, scoped, tag = 'scratch operand']
  %s0 = inlined_call_operand.vmem [shape: f32[64,48], index: 0, kind: input, shape index: {}]
  %s1 = inlined_call_operand.vmem [shape: f32[48,128], index: 1, kind: input, shape index: {}]
  %s2 = inlined_call_operand.vmem [shape: f32[1,128], index: 2, kind: input, shape index: {}]
  %s3 = inlined_call_operand.vmem [shape: f32[32,128], index: 3, kind: input, shape index: {}]
  %s4 = inlined_call_operand.vmem [shape: f32[32,128], index: 4, kind: input, shape index: {}]
  %s5 = inlined_call_operand.vmem [shape: f32[1,128], index: 5, kind: input, shape index: {}]
  %s6 = inlined_call_operand.hbm [shape: f32[64,128], index: 6, kind: output, shape index: {}]
  %s7 = sld [smem:[#allocation0]]
  $region34: #{tpu_custom_call.1} parent=0
    _
  %s9 = ssub.s32 1, %s7
  %s10 = scalar_select 0, %s9, %s7
  $region1: #{tpu_custom_call.1} parent=0
    #allocation4 [shape = 'u8[32768]{0}', space=vmem, size = 0x8000, scoped, tag = 'output window, operand 0, single buffered']
    #allocation5 [shape = 's32[1]{0}', space=sflag, size = 0x4, scoped, tag = 'scoped memory for tpu_custom_call.1']
    %11 = vsyncpa [#allocation5], 0
    // Predicated region
    $region2: #{tpu_custom_call.1} parent=1 // pred_check
      _
    $region3: #{tpu_custom_call.1} parent=1 // pred_check_branch
      %13 = sbr.rel (0) target = $region5
    $region4: #{tpu_custom_call.1} parent=1 // pred_region
      _
    $region5: #{tpu_custom_call.1} parent=1 // pred_fallthru
      _
    // Predicated region
    $region6: #{tpu_custom_call.1} parent=1 // pred_check
      _
    $region7: #{tpu_custom_call.1} parent=1 // pred_check_branch
      %15 = sbr.rel (0) target = $region9
    $region8: #{tpu_custom_call.1} parent=1 // pred_region
      _
    $region9: #{tpu_custom_call.1} parent=1 // pred_fallthru
      _
    // Predicated region
    $region10: #{tpu_custom_call.1} parent=1 // pred_check
      _
    $region11: #{tpu_custom_call.1} parent=1 // pred_check_branch
      %17 = sbr.rel (0) target = $region13
    $region12: #{tpu_custom_call.1} parent=1 // pred_region
      _
    $region13: #{tpu_custom_call.1} parent=1 // pred_fallthru
      _
    // Predicated region
    $region14: #{tpu_custom_call.1} parent=1 // pred_check
      _
    $region15: #{tpu_custom_call.1} parent=1 // pred_check_branch
      %19 = sbr.rel (0) target = $region17
    $region16: #{tpu_custom_call.1} parent=1 // pred_region
      _
    $region17: #{tpu_custom_call.1} parent=1 // pred_fallthru
      _
    // Predicated region
    $region18: #{tpu_custom_call.1} parent=1 // pred_check
      _
    $region19: #{tpu_custom_call.1} parent=1 // pred_check_branch
      %21 = sbr.rel (0) target = $region21
    $region20: #{tpu_custom_call.1} parent=1 // pred_region
      _
    $region21: #{tpu_custom_call.1} parent=1 // pred_fallthru
      _
    // Predicated region
    $region22: #{tpu_custom_call.1} parent=1 // pred_check
      _
    $region23: #{tpu_custom_call.1} parent=1 // pred_check_branch
      %23 = sbr.rel (0) target = $region25
    $region24: #{tpu_custom_call.1} parent=1 // pred_region
      _
    $region25: #{tpu_custom_call.1} parent=1 // pred_fallthru
      _
    %v24 = vld [vmem:[%s0] sm:$0xff]
    %v25 = vld [vmem:[%s0 + $0x8] sm:$0xff]
    %v26 = vld [vmem:[%s0 + $0x10] sm:$0xff]
    %v27 = vld [vmem:[%s0 + $0x18] sm:$0xff]
    %v28 = vld [vmem:[%s0 + $0x20] sm:$0xff]
    %v29 = vld [vmem:[%s0 + $0x28] sm:$0xff]
    %v30 = vld [vmem:[%s0 + $0x30] sm:$0xff]
    %v31 = vld [vmem:[%s0 + $0x38] sm:$0xff]
    %v32 = vld [vmem:[%s1] sm:$0xff]
    %v33 = vld [vmem:[%s1 + $0x8] sm:$0xff]
    %v34 = vld [vmem:[%s1 + $0x10] sm:$0xff]
    %v35 = vld [vmem:[%s1 + $0x18] sm:$0xff]
    %v36 = vld [vmem:[%s1 + $0x20] sm:$0xff]
    %v37 = vld [vmem:[%s1 + $0x28] sm:$0xff]
    %v38 = vld [vmem:[%s2] sm:$0x1]
    %v40 = vlaneseq
    %v41 = vshrl.u32 %v40, 7
    %v42 = vsub.s32 0, %v41
    %v43 = vrot.slane %v38, %v42
    %vm45 = vcmask 392192
    %v47 = vsel %vm45, %v24, 0
    %v50 = vsel %vm45, %v25, 0
    %v53 = vsel %vm45, %v26, 0
    %v56 = vsel %vm45, %v27, 0
    %v59 = vsel %vm45, %v28, 0
    %v62 = vsel %vm45, %v29, 0
    %v65 = vsel %vm45, %v30, 0
    %v68 = vsel %vm45, %v31, 0
    %70 = vmatprep.subr.mxu0 0.0
    %71 = vmatpush1.msra.mxu0 0.0
    %72 = vmatprep.subr.mxu0 0.0
    %73 = vmatpush1.msra.mxu0 0.0
    %74 = vmatprep.subr.mxu0 0.0
    %75 = vmatpush1.msra.mxu0 0.0
    %76 = vmatprep.subr.mxu0 0.0
    %77 = vmatpush1.msra.mxu0 0.0
    %78 = vmatprep.subr.mxu0 0.0
    %79 = vmatpush1.msra.mxu0 0.0
    %80 = vmatprep.subr.mxu0 0.0
    %81 = vmatpush1.msra.mxu0 0.0
    %82 = vmatprep.subr.mxu0 0.0
    %83 = vmatpush1.msra.mxu0 0.0
    %84 = vmatprep.subr.mxu0 0.0
    %85 = vmatpush1.msra.mxu0 0.0
    %86 = vmatprep.subr.mxu0 0.0
    %87 = vmatpush1.msra.mxu0 0.0
    %88 = vmatprep.subr.mxu0 0.0
    %89 = vmatpush1.msra.mxu0 0.0
    %90 = vmatprep.subr.mxu0 0.0
    %91 = vmatpush1.msra.mxu0 %v37
    %92 = vmatprep.subr.mxu0 0.0
    %93 = vmatpush1.msra.mxu0 %v36
    %94 = vmatprep.subr.mxu0 0.0
    %95 = vmatpush1.msra.mxu0 %v35
    %96 = vmatprep.subr.mxu0 0.0
    %97 = vmatpush1.msra.mxu0 %v34
    %98 = vmatprep.subr.mxu0 0.0
    %99 = vmatpush1.msra.mxu0 %v33
    %100 = vmatprep.subr.mxu0 0.0
    %101 = vmatpush1.msra.mxu0 %v32
    %102 = vmatprep.subr.mxu0 0.0
    %103 = vmatpush2.msra.mxu0 0.0
    %104 = vmatprep.subr.mxu0 0.0
    %105 = vmatpush2.msra.mxu0 0.0
    %106 = vmatprep.subr.mxu0 0.0
    %107 = vmatpush2.msra.mxu0 0.0
    %108 = vmatprep.subr.mxu0 0.0
    %109 = vmatpush2.msra.mxu0 0.0
    %110 = vmatprep.subr.mxu0 0.0
    %111 = vmatpush2.msra.mxu0 0.0
    %112 = vmatprep.subr.mxu0 0.0
    %113 = vmatpush2.msra.mxu0 0.0
    %114 = vmatprep.subr.mxu0 0.0
    %115 = vmatpush2.msra.mxu0 0.0
    %116 = vmatprep.subr.mxu0 0.0
    %117 = vmatpush2.msra.mxu0 0.0
    %118 = vmatprep.subr.mxu0 0.0
    %119 = vmatpush2.msra.mxu0 0.0
    %120 = vmatprep.subr.mxu0 0.0
    %121 = vmatpush2.msra.mxu0 0.0
    %122 = vmatprep.subr.mxu0 0.0
    %123 = vmatpush2.msra.mxu0 0.0
    %124 = vmatprep.subr.mxu0 0.0
    %125 = vmatpush2.msra.mxu0 0.0
    %126 = vmatprep.subr.mxu0 0.0
    %127 = vmatpush2.msra.mxu0 0.0
    %128 = vmatprep.subr.mxu0 0.0
    %129 = vmatpush2.msra.mxu0 0.0
    %130 = vmatprep.subr.mxu0 0.0
    %131 = vmatpush2.msra.mxu0 0.0
    %132 = vmatprep.subr.mxu0 0.0
    %133 = vmatpush2.msra.mxu0 0.0
    %134 = vmatprep.mubr.f32.mxu0 0.0
    %135 = vmatmul.mubr.f32.gmra.mxu0 %v47
    %v136 = vpop.f32.mrf.mxu0
    %v137 = vadd.f32 %v43, %v136
    %v138 = vpop.f32.mrf.mxu0
    %139 = vmatprep.mubr.f32.mxu0 0.0
    %140 = vmatmul.mubr.f32.gmra.mxu0 %v50
    %v141 = vpop.f32.mrf.mxu0
    %v142 = vadd.f32 %v43, %v141
    %v143 = vpop.f32.mrf.mxu0
    %144 = vmatprep.mubr.f32.mxu0 0.0
    %145 = vmatmul.mubr.f32.gmra.mxu0 %v53
    %v146 = vpop.f32.mrf.mxu0
    %v147 = vadd.f32 %v43, %v146
    %v148 = vpop.f32.mrf.mxu0
    %149 = vmatprep.mubr.f32.mxu0 0.0
    %150 = vmatmul.mubr.f32.gmra.mxu0 %v56
    %v151 = vpop.f32.mrf.mxu0
    %v152 = vadd.f32 %v43, %v151
    %v153 = vpop.f32.mrf.mxu0
    %154 = vmatprep.mubr.f32.mxu0 0.0
    %155 = vmatmul.mubr.f32.gmra.mxu0 %v59
    %v156 = vpop.f32.mrf.mxu0
    %v157 = vadd.f32 %v43, %v156
    %v158 = vpop.f32.mrf.mxu0
    %159 = vmatprep.mubr.f32.mxu0 0.0
    %160 = vmatmul.mubr.f32.gmra.mxu0 %v62
    %v161 = vpop.f32.mrf.mxu0
    %v162 = vadd.f32 %v43, %v161
    %v163 = vpop.f32.mrf.mxu0
    %164 = vmatprep.mubr.f32.mxu0 0.0
    %165 = vmatmul.mubr.f32.gmra.mxu0 %v65
    %v166 = vpop.f32.mrf.mxu0
    %v167 = vadd.f32 %v43, %v166
    %v168 = vpop.f32.mrf.mxu0
    %169 = vmatprep.mubr.f32.mxu0 0.0
    %170 = vmatmul.mubr.f32.gmra.mxu0 %v68
    %v171 = vpop.f32.mrf.mxu0
    %v172 = vadd.f32 %v43, %v171
    %v173 = vpop.f32.mrf.mxu0
    %174 = vdwg.mxu0
    %175 = vst [vmem:[#allocation2] sm:$0xff] %v137
    %176 = vst [vmem:[#allocation2 + $0x8] sm:$0xff] %v142
    %177 = vst [vmem:[#allocation2 + $0x10] sm:$0xff] %v147
    %178 = vst [vmem:[#allocation2 + $0x18] sm:$0xff] %v152
    %179 = vst [vmem:[#allocation2 + $0x20] sm:$0xff] %v157
    %180 = vst [vmem:[#allocation2 + $0x28] sm:$0xff] %v162
    %181 = vst [vmem:[#allocation2 + $0x30] sm:$0xff] %v167
    %182 = vst [vmem:[#allocation2 + $0x38] sm:$0xff] %v172
    %v183 = vld [vmem:[%s3] sm:$0xff]
    %v184 = vld [vmem:[%s3 + $0x8] sm:$0xff]
    %v185 = vld [vmem:[%s3 + $0x10] sm:$0xff]
    %v186 = vld [vmem:[%s3 + $0x18] sm:$0xff]
    %v187 = vld [vmem:[#allocation2] sm:$0xff]
    %vm188 = vcmask 261120
    %v190 = vsel %vm188, 0.0, 0
    %192 = vmatprep.subr.mxu0 0.0
    %193 = vmatpush1.msra.mxu0 0.0
    %194 = vmatprep.subr.mxu0 0.0
    %195 = vmatpush1.msra.mxu0 0.0
    %196 = vmatprep.subr.mxu0 0.0
    %197 = vmatpush1.msra.mxu0 0.0
    %198 = vmatprep.subr.mxu0 0.0
    %199 = vmatpush1.msra.mxu0 0.0
    %200 = vmatprep.subr.mxu0 0.0
    %201 = vmatpush1.msra.mxu0 0.0
    %202 = vmatprep.subr.mxu0 0.0
    %203 = vmatpush1.msra.mxu0 0.0
    %204 = vmatprep.subr.mxu0 0.0
    %205 = vmatpush1.msra.mxu0 0.0
    %206 = vmatprep.subr.mxu0 0.0
    %207 = vmatpush1.msra.mxu0 0.0
    %208 = vmatprep.subr.mxu0 0.0
    %209 = vmatpush1.msra.mxu0 0.0
    %210 = vmatprep.subr.mxu0 0.0
    %211 = vmatpush1.msra.mxu0 0.0
    %212 = vmatprep.subr.mxu0 0.0
    %213 = vmatpush1.msra.mxu0 0.0
    %214 = vmatprep.subr.mxu0 0.0
    %215 = vmatpush1.msra.mxu0 0.0
    %216 = vmatprep.subr.mxu0 0.0
    %217 = vmatpush1.msra.mxu0 %v186
    %218 = vmatprep.subr.mxu0 0.0
    %219 = vmatpush1.msra.mxu0 %v185
    %220 = vmatprep.subr.mxu0 0.0
    %221 = vmatpush1.msra.mxu0 %v184
    %222 = vmatprep.subr.mxu0 0.0
    %223 = vmatpush1.msra.mxu0 %v183
    %224 = vmatprep.subr.mxu0 0.0
    %225 = vmatpush2.msra.mxu0 0.0
    %226 = vmatprep.subr.mxu0 0.0
    %227 = vmatpush2.msra.mxu0 0.0
    %228 = vmatprep.subr.mxu0 0.0
    %229 = vmatpush2.msra.mxu0 0.0
    %230 = vmatprep.subr.mxu0 0.0
    %231 = vmatpush2.msra.mxu0 0.0
    %232 = vmatprep.subr.mxu0 0.0
    %233 = vmatpush2.msra.mxu0 0.0
    %234 = vmatprep.subr.mxu0 0.0
    %235 = vmatpush2.msra.mxu0 0.0
    %236 = vmatprep.subr.mxu0 0.0
    %237 = vmatpush2.msra.mxu0 0.0
    %238 = vmatprep.subr.mxu0 0.0
    %239 = vmatpush2.msra.mxu0 0.0
    %240 = vmatprep.subr.mxu0 0.0
    %241 = vmatpush2.msra.mxu0 0.0
    %242 = vmatprep.subr.mxu0 0.0
    %243 = vmatpush2.msra.mxu0 0.0
    %244 = vmatprep.subr.mxu0 0.0
    %245 = vmatpush2.msra.mxu0 0.0
    %246 = vmatprep.subr.mxu0 0.0
    %247 = vmatpush2.msra.mxu0 0.0
    %248 = vmatprep.subr.mxu0 0.0
    %249 = vmatpush2.msra.mxu0 0.0
    %250 = vmatprep.subr.mxu0 0.0
    %251 = vmatpush2.msra.mxu0 0.0
    %252 = vmatprep.subr.mxu0 0.0
    %253 = vmatpush2.msra.mxu0 0.0
    %254 = vmatprep.subr.mxu0 0.0
    %255 = vmatpush2.msra.mxu0 0.0
    %256 = vmatprep.mubr.f32.mxu0 0.0
    %257 = vmatmul.mubr.f32.gmra.mxu0 %v190
    %v258 = vpop.f32.mrf.mxu0
    %v259 = vadd.f32 0.0, %v258
    %v260 = vpop.f32.mrf.mxu0
    %261 = vdwg.mxu0
    %v262 = vadd.f32 %v187, %v259
    %v263 = vxor.u32 %v262, 2147483648
    %v264 = vmul.f32 %v263, 1.442695
    %v265 = vpow.pop %v264
    %v266 = vadd.f32 %v265, 1.0
    %v267 = vrcp.pop %v266
    %v268 = vmul.f32 1.0, %v267
    %v269 = vtanh.pop %v262
    %v270 = vmul.f32 %v268, 0.0
    %272 = vrot.lane.b32.xlu0 %v269, 64
    %v273 = vpop.permute.xlu0 %272
    %v275 = vmul.f32 %v268, %v273
    %277 = vrot.lane.b32.xlu0 %v275, 32
    %v278 = vpop.permute.xlu0 %277
    %v280 = vadd.f32 %v270, %v278
    %v281 = vtanh.pop %v280
    %283 = vrot.lane.b32.xlu0 %v281, 64
    %v284 = vpop.permute.xlu0 %283
    %v286 = vmul.f32 %v268, %v284
    %288 = vrot.lane.b32.xlu0 %v286, 32
    %v289 = vpop.permute.xlu0 %288
    %291 = vst.msk [vmem:[#allocation3] sm:$0xff] %vm188, %v289
    %s292 = scalar_lea.vmem [#allocation2], 8
    %v293 = vld [vmem:[%s292] sm:$0xff]
    %v294 = vsel %vm188, %v289, 0
    %296 = vmatprep.subr.mxu0 0.0
    %297 = vmatpush1.msra.mxu0 0.0
    %298 = vmatprep.subr.mxu0 0.0
    %299 = vmatpush1.msra.mxu0 0.0
    %300 = vmatprep.subr.mxu0 0.0
    %301 = vmatpush1.msra.mxu0 0.0
    %302 = vmatprep.subr.mxu0 0.0
    %303 = vmatpush1.msra.mxu0 0.0
    %304 = vmatprep.subr.mxu0 0.0
    %305 = vmatpush1.msra.mxu0 0.0
    %306 = vmatprep.subr.mxu0 0.0
    %307 = vmatpush1.msra.mxu0 0.0
    %308 = vmatprep.subr.mxu0 0.0
    %309 = vmatpush1.msra.mxu0 0.0
    %310 = vmatprep.subr.mxu0 0.0
    %311 = vmatpush1.msra.mxu0 0.0
    %312 = vmatprep.subr.mxu0 0.0
    %313 = vmatpush1.msra.mxu0 0.0
    %314 = vmatprep.subr.mxu0 0.0
    %315 = vmatpush1.msra.mxu0 0.0
    %316 = vmatprep.subr.mxu0 0.0
    %317 = vmatpush1.msra.mxu0 0.0
    %318 = vmatprep.subr.mxu0 0.0
    %319 = vmatpush1.msra.mxu0 0.0
    %320 = vmatprep.subr.mxu0 0.0
    %321 = vmatpush1.msra.mxu0 %v186
    %322 = vmatprep.subr.mxu0 0.0
    %323 = vmatpush1.msra.mxu0 %v185
    %324 = vmatprep.subr.mxu0 0.0
    %325 = vmatpush1.msra.mxu0 %v184
    %326 = vmatprep.subr.mxu0 0.0
    %327 = vmatpush1.msra.mxu0 %v183
    %328 = vmatprep.subr.mxu0 0.0
    %329 = vmatpush2.msra.mxu0 0.0
    %330 = vmatprep.subr.mxu0 0.0
    %331 = vmatpush2.msra.mxu0 0.0
    %332 = vmatprep.subr.mxu0 0.0
    %333 = vmatpush2.msra.mxu0 0.0
    %334 = vmatprep.subr.mxu0 0.0
    %335 = vmatpush2.msra.mxu0 0.0
    %336 = vmatprep.subr.mxu0 0.0
    %337 = vmatpush2.msra.mxu0 0.0
    %338 = vmatprep.subr.mxu0 0.0
    %339 = vmatpush2.msra.mxu0 0.0
    %340 = vmatprep.subr.mxu0 0.0
    %341 = vmatpush2.msra.mxu0 0.0
    %342 = vmatprep.subr.mxu0 0.0
    %343 = vmatpush2.msra.mxu0 0.0
    %344 = vmatprep.subr.mxu0 0.0
    %345 = vmatpush2.msra.mxu0 0.0
    %346 = vmatprep.subr.mxu0 0.0
    %347 = vmatpush2.msra.mxu0 0.0
    %348 = vmatprep.subr.mxu0 0.0
    %349 = vmatpush2.msra.mxu0 0.0
    %350 = vmatprep.subr.mxu0 0.0
    %351 = vmatpush2.msra.mxu0 0.0
    %352 = vmatprep.subr.mxu0 0.0
    %353 = vmatpush2.msra.mxu0 0.0
    %354 = vmatprep.subr.mxu0 0.0
    %355 = vmatpush2.msra.mxu0 0.0
    %356 = vmatprep.subr.mxu0 0.0
    %357 = vmatpush2.msra.mxu0 0.0
    %358 = vmatprep.subr.mxu0 0.0
    %359 = vmatpush2.msra.mxu0 0.0
    %360 = vmatprep.mubr.f32.mxu0 0.0
    %361 = vmatmul.mubr.f32.gmra.mxu0 %v294
    %v362 = vpop.f32.mrf.mxu0
    %v363 = vadd.f32 0.0, %v362
    %v364 = vpop.f32.mrf.mxu0
    %365 = vdwg.mxu0
    %v366 = vadd.f32 %v293, %v363
    %v367 = vxor.u32 %v366, 2147483648
    %v368 = vmul.f32 %v367, 1.442695
    %v369 = vpow.pop %v368
    %v370 = vadd.f32 %v369, 1.0
    %v371 = vrcp.pop %v370
    %v372 = vmul.f32 1.0, %v371
    %v373 = vtanh.pop %v366
    %v374 = vmul.f32 %v372, %v280
    %376 = vrot.lane.b32.xlu0 %v373, 64
    %v377 = vpop.permute.xlu0 %376
    %v379 = vmul.f32 %v372, %v377
    %381 = vrot.lane.b32.xlu0 %v379, 32
    %v382 = vpop.permute.xlu0 %381
    %v384 = vadd.f32 %v374, %v382
    %v385 = vtanh.pop %v384
    %387 = vrot.lane.b32.xlu0 %v385, 64
    %v388 = vpop.permute.xlu0 %387
    %v390 = vmul.f32 %v372, %v388
    %392 = vrot.lane.b32.xlu0 %v390, 32
    %v393 = vpop.permute.xlu0 %392
    %s395 = scalar_lea.vmem [#allocation3], 8
    %396 = vst.msk [vmem:[%s395] sm:$0xff] %vm188, %v393
    %s397 = scalar_lea.vmem [#allocation2], 16
    %v398 = vld [vmem:[%s397] sm:$0xff]
    %v399 = vsel %vm188, %v393, 0
    %401 = vmatprep.subr.mxu0 0.0
    %402 = vmatpush1.msra.mxu0 0.0
    %403 = vmatprep.subr.mxu0 0.0
    %404 = vmatpush1.msra.mxu0 0.0
    %405 = vmatprep.subr.mxu0 0.0
    %406 = vmatpush1.msra.mxu0 0.0
    %407 = vmatprep.subr.mxu0 0.0
    %408 = vmatpush1.msra.mxu0 0.0
    %409 = vmatprep.subr.mxu0 0.0
    %410 = vmatpush1.msra.mxu0 0.0
    %411 = vmatprep.subr.mxu0 0.0
    %412 = vmatpush1.msra.mxu0 0.0
    %413 = vmatprep.subr.mxu0 0.0
    %414 = vmatpush1.msra.mxu0 0.0
    %415 = vmatprep.subr.mxu0 0.0
    %416 = vmatpush1.msra.mxu0 0.0
    %417 = vmatprep.subr.mxu0 0.0
    %418 = vmatpush1.msra.mxu0 0.0
    %419 = vmatprep.subr.mxu0 0.0
    %420 = vmatpush1.msra.mxu0 0.0
    %421 = vmatprep.subr.mxu0 0.0
    %422 = vmatpush1.msra.mxu0 0.0
    %423 = vmatprep.subr.mxu0 0.0
    %424 = vmatpush1.msra.mxu0 0.0
    %425 = vmatprep.subr.mxu0 0.0
    %426 = vmatpush1.msra.mxu0 %v186
    %427 = vmatprep.subr.mxu0 0.0
    %428 = vmatpush1.msra.mxu0 %v185
    %429 = vmatprep.subr.mxu0 0.0
    %430 = vmatpush1.msra.mxu0 %v184
    %431 = vmatprep.subr.mxu0 0.0
    %432 = vmatpush1.msra.mxu0 %v183
    %433 = vmatprep.subr.mxu0 0.0
    %434 = vmatpush2.msra.mxu0 0.0
    %435 = vmatprep.subr.mxu0 0.0
    %436 = vmatpush2.msra.mxu0 0.0
    %437 = vmatprep.subr.mxu0 0.0
    %438 = vmatpush2.msra.mxu0 0.0
    %439 = vmatprep.subr.mxu0 0.0
    %440 = vmatpush2.msra.mxu0 0.0
    %441 = vmatprep.subr.mxu0 0.0
    %442 = vmatpush2.msra.mxu0 0.0
    %443 = vmatprep.subr.mxu0 0.0
    %444 = vmatpush2.msra.mxu0 0.0
    %445 = vmatprep.subr.mxu0 0.0
    %446 = vmatpush2.msra.mxu0 0.0
    %447 = vmatprep.subr.mxu0 0.0
    %448 = vmatpush2.msra.mxu0 0.0
    %449 = vmatprep.subr.mxu0 0.0
    %450 = vmatpush2.msra.mxu0 0.0
    %451 = vmatprep.subr.mxu0 0.0
    %452 = vmatpush2.msra.mxu0 0.0
    %453 = vmatprep.subr.mxu0 0.0
    %454 = vmatpush2.msra.mxu0 0.0
    %455 = vmatprep.subr.mxu0 0.0
    %456 = vmatpush2.msra.mxu0 0.0
    %457 = vmatprep.subr.mxu0 0.0
    %458 = vmatpush2.msra.mxu0 0.0
    %459 = vmatprep.subr.mxu0 0.0
    %460 = vmatpush2.msra.mxu0 0.0
    %461 = vmatprep.subr.mxu0 0.0
    %462 = vmatpush2.msra.mxu0 0.0
    %463 = vmatprep.subr.mxu0 0.0
    %464 = vmatpush2.msra.mxu0 0.0
    %465 = vmatprep.mubr.f32.mxu0 0.0
    %466 = vmatmul.mubr.f32.gmra.mxu0 %v399
    %v467 = vpop.f32.mrf.mxu0
    %v468 = vadd.f32 0.0, %v467
    %v469 = vpop.f32.mrf.mxu0
    %470 = vdwg.mxu0
    %v471 = vadd.f32 %v398, %v468
    %v472 = vxor.u32 %v471, 2147483648
    %v473 = vmul.f32 %v472, 1.442695
    %v474 = vpow.pop %v473
    %v475 = vadd.f32 %v474, 1.0
    %v476 = vrcp.pop %v475
    %v477 = vmul.f32 1.0, %v476
    %v478 = vtanh.pop %v471
    %v479 = vmul.f32 %v477, %v384
    %481 = vrot.lane.b32.xlu0 %v478, 64
    %v482 = vpop.permute.xlu0 %481
    %v484 = vmul.f32 %v477, %v482
    %486 = vrot.lane.b32.xlu0 %v484, 32
    %v487 = vpop.permute.xlu0 %486
    %v489 = vadd.f32 %v479, %v487
    %v490 = vtanh.pop %v489
    %492 = vrot.lane.b32.xlu0 %v490, 64
    %v493 = vpop.permute.xlu0 %492
    %v495 = vmul.f32 %v477, %v493
    %497 = vrot.lane.b32.xlu0 %v495, 32
    %v498 = vpop.permute.xlu0 %497
    %s500 = scalar_lea.vmem [#allocation3], 16
    %501 = vst.msk [vmem:[%s500] sm:$0xff] %vm188, %v498
    %s502 = scalar_lea.vmem [#allocation2], 24
    %v503 = vld [vmem:[%s502] sm:$0xff]
    %v504 = vsel %vm188, %v498, 0
    %506 = vmatprep.subr.mxu0 0.0
    %507 = vmatpush1.msra.mxu0 0.0
    %508 = vmatprep.subr.mxu0 0.0
    %509 = vmatpush1.msra.mxu0 0.0
    %510 = vmatprep.subr.mxu0 0.0
    %511 = vmatpush1.msra.mxu0 0.0
    %512 = vmatprep.subr.mxu0 0.0
    %513 = vmatpush1.msra.mxu0 0.0
    %514 = vmatprep.subr.mxu0 0.0
    %515 = vmatpush1.msra.mxu0 0.0
    %516 = vmatprep.subr.mxu0 0.0
    %517 = vmatpush1.msra.mxu0 0.0
    %518 = vmatprep.subr.mxu0 0.0
    %519 = vmatpush1.msra.mxu0 0.0
    %520 = vmatprep.subr.mxu0 0.0
    %521 = vmatpush1.msra.mxu0 0.0
    %522 = vmatprep.subr.mxu0 0.0
    %523 = vmatpush1.msra.mxu0 0.0
    %524 = vmatprep.subr.mxu0 0.0
    %525 = vmatpush1.msra.mxu0 0.0
    %526 = vmatprep.subr.mxu0 0.0
    %527 = vmatpush1.msra.mxu0 0.0
    %528 = vmatprep.subr.mxu0 0.0
    %529 = vmatpush1.msra.mxu0 0.0
    %530 = vmatprep.subr.mxu0 0.0
    %531 = vmatpush1.msra.mxu0 %v186
    %532 = vmatprep.subr.mxu0 0.0
    %533 = vmatpush1.msra.mxu0 %v185
    %534 = vmatprep.subr.mxu0 0.0
    %535 = vmatpush1.msra.mxu0 %v184
    %536 = vmatprep.subr.mxu0 0.0
    %537 = vmatpush1.msra.mxu0 %v183
    %538 = vmatprep.subr.mxu0 0.0
    %539 = vmatpush2.msra.mxu0 0.0
    %540 = vmatprep.subr.mxu0 0.0
    %541 = vmatpush2.msra.mxu0 0.0
    %542 = vmatprep.subr.mxu0 0.0
    %543 = vmatpush2.msra.mxu0 0.0
    %544 = vmatprep.subr.mxu0 0.0
    %545 = vmatpush2.msra.mxu0 0.0
    %546 = vmatprep.subr.mxu0 0.0
    %547 = vmatpush2.msra.mxu0 0.0
    %548 = vmatprep.subr.mxu0 0.0
    %549 = vmatpush2.msra.mxu0 0.0
    %550 = vmatprep.subr.mxu0 0.0
    %551 = vmatpush2.msra.mxu0 0.0
    %552 = vmatprep.subr.mxu0 0.0
    %553 = vmatpush2.msra.mxu0 0.0
    %554 = vmatprep.subr.mxu0 0.0
    %555 = vmatpush2.msra.mxu0 0.0
    %556 = vmatprep.subr.mxu0 0.0
    %557 = vmatpush2.msra.mxu0 0.0
    %558 = vmatprep.subr.mxu0 0.0
    %559 = vmatpush2.msra.mxu0 0.0
    %560 = vmatprep.subr.mxu0 0.0
    %561 = vmatpush2.msra.mxu0 0.0
    %562 = vmatprep.subr.mxu0 0.0
    %563 = vmatpush2.msra.mxu0 0.0
    %564 = vmatprep.subr.mxu0 0.0
    %565 = vmatpush2.msra.mxu0 0.0
    %566 = vmatprep.subr.mxu0 0.0
    %567 = vmatpush2.msra.mxu0 0.0
    %568 = vmatprep.subr.mxu0 0.0
    %569 = vmatpush2.msra.mxu0 0.0
    %570 = vmatprep.mubr.f32.mxu0 0.0
    %571 = vmatmul.mubr.f32.gmra.mxu0 %v504
    %v572 = vpop.f32.mrf.mxu0
    %v573 = vadd.f32 0.0, %v572
    %v574 = vpop.f32.mrf.mxu0
    %575 = vdwg.mxu0
    %v576 = vadd.f32 %v503, %v573
    %v577 = vxor.u32 %v576, 2147483648
    %v578 = vmul.f32 %v577, 1.442695
    %v579 = vpow.pop %v578
    %v580 = vadd.f32 %v579, 1.0
    %v581 = vrcp.pop %v580
    %v582 = vmul.f32 1.0, %v581
    %v583 = vtanh.pop %v576
    %v584 = vmul.f32 %v582, %v489
    %586 = vrot.lane.b32.xlu0 %v583, 64
    %v587 = vpop.permute.xlu0 %586
    %v589 = vmul.f32 %v582, %v587
    %591 = vrot.lane.b32.xlu0 %v589, 32
    %v592 = vpop.permute.xlu0 %591
    %v594 = vadd.f32 %v584, %v592
    %v595 = vtanh.pop %v594
    %597 = vrot.lane.b32.xlu0 %v595, 64
    %v598 = vpop.permute.xlu0 %597
    %v600 = vmul.f32 %v582, %v598
    %602 = vrot.lane.b32.xlu0 %v600, 32
    %v603 = vpop.permute.xlu0 %602
    %s605 = scalar_lea.vmem [#allocation3], 24
    %606 = vst.msk [vmem:[%s605] sm:$0xff] %vm188, %v603
    %s607 = scalar_lea.vmem [#allocation2], 32
    %v608 = vld [vmem:[%s607] sm:$0xff]
    %v609 = vsel %vm188, %v603, 0
    %611 = vmatprep.subr.mxu0 0.0
    %612 = vmatpush1.msra.mxu0 0.0
    %613 = vmatprep.subr.mxu0 0.0
    %614 = vmatpush1.msra.mxu0 0.0
    %615 = vmatprep.subr.mxu0 0.0
    %616 = vmatpush1.msra.mxu0 0.0
    %617 = vmatprep.subr.mxu0 0.0
    %618 = vmatpush1.msra.mxu0 0.0
    %619 = vmatprep.subr.mxu0 0.0
    %620 = vmatpush1.msra.mxu0 0.0
    %621 = vmatprep.subr.mxu0 0.0
    %622 = vmatpush1.msra.mxu0 0.0
    %623 = vmatprep.subr.mxu0 0.0
    %624 = vmatpush1.msra.mxu0 0.0
    %625 = vmatprep.subr.mxu0 0.0
    %626 = vmatpush1.msra.mxu0 0.0
    %627 = vmatprep.subr.mxu0 0.0
    %628 = vmatpush1.msra.mxu0 0.0
    %629 = vmatprep.subr.mxu0 0.0
    %630 = vmatpush1.msra.mxu0 0.0
    %631 = vmatprep.subr.mxu0 0.0
    %632 = vmatpush1.msra.mxu0 0.0
    %633 = vmatprep.subr.mxu0 0.0
    %634 = vmatpush1.msra.mxu0 0.0
    %635 = vmatprep.subr.mxu0 0.0
    %636 = vmatpush1.msra.mxu0 %v186
    %637 = vmatprep.subr.mxu0 0.0
    %638 = vmatpush1.msra.mxu0 %v185
    %639 = vmatprep.subr.mxu0 0.0
    %640 = vmatpush1.msra.mxu0 %v184
    %641 = vmatprep.subr.mxu0 0.0
    %642 = vmatpush1.msra.mxu0 %v183
    %643 = vmatprep.subr.mxu0 0.0
    %644 = vmatpush2.msra.mxu0 0.0
    %645 = vmatprep.subr.mxu0 0.0
    %646 = vmatpush2.msra.mxu0 0.0
    %647 = vmatprep.subr.mxu0 0.0
    %648 = vmatpush2.msra.mxu0 0.0
    %649 = vmatprep.subr.mxu0 0.0
    %650 = vmatpush2.msra.mxu0 0.0
    %651 = vmatprep.subr.mxu0 0.0
    %652 = vmatpush2.msra.mxu0 0.0
    %653 = vmatprep.subr.mxu0 0.0
    %654 = vmatpush2.msra.mxu0 0.0
    %655 = vmatprep.subr.mxu0 0.0
    %656 = vmatpush2.msra.mxu0 0.0
    %657 = vmatprep.subr.mxu0 0.0
    %658 = vmatpush2.msra.mxu0 0.0
    %659 = vmatprep.subr.mxu0 0.0
    %660 = vmatpush2.msra.mxu0 0.0
    %661 = vmatprep.subr.mxu0 0.0
    %662 = vmatpush2.msra.mxu0 0.0
    %663 = vmatprep.subr.mxu0 0.0
    %664 = vmatpush2.msra.mxu0 0.0
    %665 = vmatprep.subr.mxu0 0.0
    %666 = vmatpush2.msra.mxu0 0.0
    %667 = vmatprep.subr.mxu0 0.0
    %668 = vmatpush2.msra.mxu0 0.0
    %669 = vmatprep.subr.mxu0 0.0
    %670 = vmatpush2.msra.mxu0 0.0
    %671 = vmatprep.subr.mxu0 0.0
    %672 = vmatpush2.msra.mxu0 0.0
    %673 = vmatprep.subr.mxu0 0.0
    %674 = vmatpush2.msra.mxu0 0.0
    %675 = vmatprep.mubr.f32.mxu0 0.0
    %676 = vmatmul.mubr.f32.gmra.mxu0 %v609
    %v677 = vpop.f32.mrf.mxu0
    %v678 = vadd.f32 0.0, %v677
    %v679 = vpop.f32.mrf.mxu0
    %680 = vdwg.mxu0
    %v681 = vadd.f32 %v608, %v678
    %v682 = vxor.u32 %v681, 2147483648
    %v683 = vmul.f32 %v682, 1.442695
    %v684 = vpow.pop %v683
    %v685 = vadd.f32 %v684, 1.0
    %v686 = vrcp.pop %v685
    %v687 = vmul.f32 1.0, %v686
    %v688 = vtanh.pop %v681
    %v689 = vmul.f32 %v687, %v594
    %691 = vrot.lane.b32.xlu0 %v688, 64
    %v692 = vpop.permute.xlu0 %691
    %v694 = vmul.f32 %v687, %v692
    %696 = vrot.lane.b32.xlu0 %v694, 32
    %v697 = vpop.permute.xlu0 %696
    %v699 = vadd.f32 %v689, %v697
    %v700 = vtanh.pop %v699
    %702 = vrot.lane.b32.xlu0 %v700, 64
    %v703 = vpop.permute.xlu0 %702
    %v705 = vmul.f32 %v687, %v703
    %707 = vrot.lane.b32.xlu0 %v705, 32
    %v708 = vpop.permute.xlu0 %707
    %s710 = scalar_lea.vmem [#allocation3], 32
    %711 = vst.msk [vmem:[%s710] sm:$0xff] %vm188, %v708
    %s712 = scalar_lea.vmem [#allocation2], 40
    %v713 = vld [vmem:[%s712] sm:$0xff]
    %v714 = vsel %vm188, %v708, 0
    %716 = vmatprep.subr.mxu0 0.0
    %717 = vmatpush1.msra.mxu0 0.0
    %718 = vmatprep.subr.mxu0 0.0
    %719 = vmatpush1.msra.mxu0 0.0
    %720 = vmatprep.subr.mxu0 0.0
    %721 = vmatpush1.msra.mxu0 0.0
    %722 = vmatprep.subr.mxu0 0.0
    %723 = vmatpush1.msra.mxu0 0.0
    %724 = vmatprep.subr.mxu0 0.0
    %725 = vmatpush1.msra.mxu0 0.0
    %726 = vmatprep.subr.mxu0 0.0
    %727 = vmatpush1.msra.mxu0 0.0
    %728 = vmatprep.subr.mxu0 0.0
    %729 = vmatpush1.msra.mxu0 0.0
    %730 = vmatprep.subr.mxu0 0.0
    %731 = vmatpush1.msra.mxu0 0.0
    %732 = vmatprep.subr.mxu0 0.0
    %733 = vmatpush1.msra.mxu0 0.0
    %734 = vmatprep.subr.mxu0 0.0
    %735 = vmatpush1.msra.mxu0 0.0
    %736 = vmatprep.subr.mxu0 0.0
    %737 = vmatpush1.msra.mxu0 0.0
    %738 = vmatprep.subr.mxu0 0.0
    %739 = vmatpush1.msra.mxu0 0.0
    %740 = vmatprep.subr.mxu0 0.0
    %741 = vmatpush1.msra.mxu0 %v186
    %742 = vmatprep.subr.mxu0 0.0
    %743 = vmatpush1.msra.mxu0 %v185
    %744 = vmatprep.subr.mxu0 0.0
    %745 = vmatpush1.msra.mxu0 %v184
    %746 = vmatprep.subr.mxu0 0.0
    %747 = vmatpush1.msra.mxu0 %v183
    %748 = vmatprep.subr.mxu0 0.0
    %749 = vmatpush2.msra.mxu0 0.0
    %750 = vmatprep.subr.mxu0 0.0
    %751 = vmatpush2.msra.mxu0 0.0
    %752 = vmatprep.subr.mxu0 0.0
    %753 = vmatpush2.msra.mxu0 0.0
    %754 = vmatprep.subr.mxu0 0.0
    %755 = vmatpush2.msra.mxu0 0.0
    %756 = vmatprep.subr.mxu0 0.0
    %757 = vmatpush2.msra.mxu0 0.0
    %758 = vmatprep.subr.mxu0 0.0
    %759 = vmatpush2.msra.mxu0 0.0
    %760 = vmatprep.subr.mxu0 0.0
    %761 = vmatpush2.msra.mxu0 0.0
    %762 = vmatprep.subr.mxu0 0.0
    %763 = vmatpush2.msra.mxu0 0.0
    %764 = vmatprep.subr.mxu0 0.0
    %765 = vmatpush2.msra.mxu0 0.0
    %766 = vmatprep.subr.mxu0 0.0
    %767 = vmatpush2.msra.mxu0 0.0
    %768 = vmatprep.subr.mxu0 0.0
    %769 = vmatpush2.msra.mxu0 0.0
    %770 = vmatprep.subr.mxu0 0.0
    %771 = vmatpush2.msra.mxu0 0.0
    %772 = vmatprep.subr.mxu0 0.0
    %773 = vmatpush2.msra.mxu0 0.0
    %774 = vmatprep.subr.mxu0 0.0
    %775 = vmatpush2.msra.mxu0 0.0
    %776 = vmatprep.subr.mxu0 0.0
    %777 = vmatpush2.msra.mxu0 0.0
    %778 = vmatprep.subr.mxu0 0.0
    %779 = vmatpush2.msra.mxu0 0.0
    %780 = vmatprep.mubr.f32.mxu0 0.0
    %781 = vmatmul.mubr.f32.gmra.mxu0 %v714
    %v782 = vpop.f32.mrf.mxu0
    %v783 = vadd.f32 0.0, %v782
    %v784 = vpop.f32.mrf.mxu0
    %785 = vdwg.mxu0
    %v786 = vadd.f32 %v713, %v783
    %v787 = vxor.u32 %v786, 2147483648
    %v788 = vmul.f32 %v787, 1.442695
    %v789 = vpow.pop %v788
    %v790 = vadd.f32 %v789, 1.0
    %v791 = vrcp.pop %v790
    %v792 = vmul.f32 1.0, %v791
    %v793 = vtanh.pop %v786
    %v794 = vmul.f32 %v792, %v699
    %796 = vrot.lane.b32.xlu0 %v793, 64
    %v797 = vpop.permute.xlu0 %796
    %v799 = vmul.f32 %v792, %v797
    %801 = vrot.lane.b32.xlu0 %v799, 32
    %v802 = vpop.permute.xlu0 %801
    %v804 = vadd.f32 %v794, %v802
    %v805 = vtanh.pop %v804
    %807 = vrot.lane.b32.xlu0 %v805, 64
    %v808 = vpop.permute.xlu0 %807
    %v810 = vmul.f32 %v792, %v808
    %812 = vrot.lane.b32.xlu0 %v810, 32
    %v813 = vpop.permute.xlu0 %812
    %s815 = scalar_lea.vmem [#allocation3], 40
    %816 = vst.msk [vmem:[%s815] sm:$0xff] %vm188, %v813
    %s817 = scalar_lea.vmem [#allocation2], 48
    %v818 = vld [vmem:[%s817] sm:$0xff]
    %v819 = vsel %vm188, %v813, 0
    %821 = vmatprep.subr.mxu0 0.0
    %822 = vmatpush1.msra.mxu0 0.0
    %823 = vmatprep.subr.mxu0 0.0
    %824 = vmatpush1.msra.mxu0 0.0
    %825 = vmatprep.subr.mxu0 0.0
    %826 = vmatpush1.msra.mxu0 0.0
    %827 = vmatprep.subr.mxu0 0.0
    %828 = vmatpush1.msra.mxu0 0.0
    %829 = vmatprep.subr.mxu0 0.0
    %830 = vmatpush1.msra.mxu0 0.0
    %831 = vmatprep.subr.mxu0 0.0
    %832 = vmatpush1.msra.mxu0 0.0
    %833 = vmatprep.subr.mxu0 0.0
    %834 = vmatpush1.msra.mxu0 0.0
    %835 = vmatprep.subr.mxu0 0.0
    %836 = vmatpush1.msra.mxu0 0.0
    %837 = vmatprep.subr.mxu0 0.0
    %838 = vmatpush1.msra.mxu0 0.0
    %839 = vmatprep.subr.mxu0 0.0
    %840 = vmatpush1.msra.mxu0 0.0
    %841 = vmatprep.subr.mxu0 0.0
    %842 = vmatpush1.msra.mxu0 0.0
    %843 = vmatprep.subr.mxu0 0.0
    %844 = vmatpush1.msra.mxu0 0.0
    %845 = vmatprep.subr.mxu0 0.0
    %846 = vmatpush1.msra.mxu0 %v186
    %847 = vmatprep.subr.mxu0 0.0
    %848 = vmatpush1.msra.mxu0 %v185
    %849 = vmatprep.subr.mxu0 0.0
    %850 = vmatpush1.msra.mxu0 %v184
    %851 = vmatprep.subr.mxu0 0.0
    %852 = vmatpush1.msra.mxu0 %v183
    %853 = vmatprep.subr.mxu0 0.0
    %854 = vmatpush2.msra.mxu0 0.0
    %855 = vmatprep.subr.mxu0 0.0
    %856 = vmatpush2.msra.mxu0 0.0
    %857 = vmatprep.subr.mxu0 0.0
    %858 = vmatpush2.msra.mxu0 0.0
    %859 = vmatprep.subr.mxu0 0.0
    %860 = vmatpush2.msra.mxu0 0.0
    %861 = vmatprep.subr.mxu0 0.0
    %862 = vmatpush2.msra.mxu0 0.0
    %863 = vmatprep.subr.mxu0 0.0
    %864 = vmatpush2.msra.mxu0 0.0
    %865 = vmatprep.subr.mxu0 0.0
    %866 = vmatpush2.msra.mxu0 0.0
    %867 = vmatprep.subr.mxu0 0.0
    %868 = vmatpush2.msra.mxu0 0.0
    %869 = vmatprep.subr.mxu0 0.0
    %870 = vmatpush2.msra.mxu0 0.0
    %871 = vmatprep.subr.mxu0 0.0
    %872 = vmatpush2.msra.mxu0 0.0
    %873 = vmatprep.subr.mxu0 0.0
    %874 = vmatpush2.msra.mxu0 0.0
    %875 = vmatprep.subr.mxu0 0.0
    %876 = vmatpush2.msra.mxu0 0.0
    %877 = vmatprep.subr.mxu0 0.0
    %878 = vmatpush2.msra.mxu0 0.0
    %879 = vmatprep.subr.mxu0 0.0
    %880 = vmatpush2.msra.mxu0 0.0
    %881 = vmatprep.subr.mxu0 0.0
    %882 = vmatpush2.msra.mxu0 0.0
    %883 = vmatprep.subr.mxu0 0.0
    %884 = vmatpush2.msra.mxu0 0.0
    %885 = vmatprep.mubr.f32.mxu0 0.0
    %886 = vmatmul.mubr.f32.gmra.mxu0 %v819
    %v887 = vpop.f32.mrf.mxu0
    %v888 = vadd.f32 0.0, %v887
    %v889 = vpop.f32.mrf.mxu0
    %890 = vdwg.mxu0
    %v891 = vadd.f32 %v818, %v888
    %v892 = vxor.u32 %v891, 2147483648
    %v893 = vmul.f32 %v892, 1.442695
    %v894 = vpow.pop %v893
    %v895 = vadd.f32 %v894, 1.0
    %v896 = vrcp.pop %v895
    %v897 = vmul.f32 1.0, %v896
    %v898 = vtanh.pop %v891
    %v899 = vmul.f32 %v897, %v804
    %901 = vrot.lane.b32.xlu0 %v898, 64
    %v902 = vpop.permute.xlu0 %901
    %v904 = vmul.f32 %v897, %v902
    %906 = vrot.lane.b32.xlu0 %v904, 32
    %v907 = vpop.permute.xlu0 %906
    %v909 = vadd.f32 %v899, %v907
    %v910 = vtanh.pop %v909
    %912 = vrot.lane.b32.xlu0 %v910, 64
    %v913 = vpop.permute.xlu0 %912
    %v915 = vmul.f32 %v897, %v913
    %917 = vrot.lane.b32.xlu0 %v915, 32
    %v918 = vpop.permute.xlu0 %917
    %s920 = scalar_lea.vmem [#allocation3], 48
    %921 = vst.msk [vmem:[%s920] sm:$0xff] %vm188, %v918
    %s922 = scalar_lea.vmem [#allocation2], 56
    %v923 = vld [vmem:[%s922] sm:$0xff]
    %v924 = vsel %vm188, %v918, 0
    %926 = vmatprep.subr.mxu0 0.0
    %927 = vmatpush1.msra.mxu0 0.0
    %928 = vmatprep.subr.mxu0 0.0
    %929 = vmatpush1.msra.mxu0 0.0
    %930 = vmatprep.subr.mxu0 0.0
    %931 = vmatpush1.msra.mxu0 0.0
    %932 = vmatprep.subr.mxu0 0.0
    %933 = vmatpush1.msra.mxu0 0.0
    %934 = vmatprep.subr.mxu0 0.0
    %935 = vmatpush1.msra.mxu0 0.0
    %936 = vmatprep.subr.mxu0 0.0
    %937 = vmatpush1.msra.mxu0 0.0
    %938 = vmatprep.subr.mxu0 0.0
    %939 = vmatpush1.msra.mxu0 0.0
    %940 = vmatprep.subr.mxu0 0.0
    %941 = vmatpush1.msra.mxu0 0.0
    %942 = vmatprep.subr.mxu0 0.0
    %943 = vmatpush1.msra.mxu0 0.0
    %944 = vmatprep.subr.mxu0 0.0
    %945 = vmatpush1.msra.mxu0 0.0
    %946 = vmatprep.subr.mxu0 0.0
    %947 = vmatpush1.msra.mxu0 0.0
    %948 = vmatprep.subr.mxu0 0.0
    %949 = vmatpush1.msra.mxu0 0.0
    %950 = vmatprep.subr.mxu0 0.0
    %951 = vmatpush1.msra.mxu0 %v186
    %952 = vmatprep.subr.mxu0 0.0
    %953 = vmatpush1.msra.mxu0 %v185
    %954 = vmatprep.subr.mxu0 0.0
    %955 = vmatpush1.msra.mxu0 %v184
    %956 = vmatprep.subr.mxu0 0.0
    %957 = vmatpush1.msra.mxu0 %v183
    %958 = vmatprep.subr.mxu0 0.0
    %959 = vmatpush2.msra.mxu0 0.0
    %960 = vmatprep.subr.mxu0 0.0
    %961 = vmatpush2.msra.mxu0 0.0
    %962 = vmatprep.subr.mxu0 0.0
    %963 = vmatpush2.msra.mxu0 0.0
    %964 = vmatprep.subr.mxu0 0.0
    %965 = vmatpush2.msra.mxu0 0.0
    %966 = vmatprep.subr.mxu0 0.0
    %967 = vmatpush2.msra.mxu0 0.0
    %968 = vmatprep.subr.mxu0 0.0
    %969 = vmatpush2.msra.mxu0 0.0
    %970 = vmatprep.subr.mxu0 0.0
    %971 = vmatpush2.msra.mxu0 0.0
    %972 = vmatprep.subr.mxu0 0.0
    %973 = vmatpush2.msra.mxu0 0.0
    %974 = vmatprep.subr.mxu0 0.0
    %975 = vmatpush2.msra.mxu0 0.0
    %976 = vmatprep.subr.mxu0 0.0
    %977 = vmatpush2.msra.mxu0 0.0
    %978 = vmatprep.subr.mxu0 0.0
    %979 = vmatpush2.msra.mxu0 0.0
    %980 = vmatprep.subr.mxu0 0.0
    %981 = vmatpush2.msra.mxu0 0.0
    %982 = vmatprep.subr.mxu0 0.0
    %983 = vmatpush2.msra.mxu0 0.0
    %984 = vmatprep.subr.mxu0 0.0
    %985 = vmatpush2.msra.mxu0 0.0
    %986 = vmatprep.subr.mxu0 0.0
    %987 = vmatpush2.msra.mxu0 0.0
    %988 = vmatprep.subr.mxu0 0.0
    %989 = vmatpush2.msra.mxu0 0.0
    %990 = vmatprep.mubr.f32.mxu0 0.0
    %991 = vmatmul.mubr.f32.gmra.mxu0 %v924
    %v992 = vpop.f32.mrf.mxu0
    %v993 = vadd.f32 0.0, %v992
    %v994 = vpop.f32.mrf.mxu0
    %995 = vdwg.mxu0
    %v996 = vadd.f32 %v923, %v993
    %v997 = vxor.u32 %v996, 2147483648
    %v998 = vmul.f32 %v997, 1.442695
    %v999 = vpow.pop %v998
    %v1000 = vadd.f32 %v999, 1.0
    %v1001 = vrcp.pop %v1000
    %v1002 = vmul.f32 1.0, %v1001
    %v1003 = vtanh.pop %v996
    %v1004 = vmul.f32 %v1002, %v909
    %1006 = vrot.lane.b32.xlu0 %v1003, 64
    %v1007 = vpop.permute.xlu0 %1006
    %v1009 = vmul.f32 %v1002, %v1007
    %1011 = vrot.lane.b32.xlu0 %v1009, 32
    %v1012 = vpop.permute.xlu0 %1011
    %v1014 = vadd.f32 %v1004, %v1012
    %v1015 = vtanh.pop %v1014
    %1017 = vrot.lane.b32.xlu0 %v1015, 64
    %v1018 = vpop.permute.xlu0 %1017
    %v1020 = vmul.f32 %v1002, %v1018
    %1022 = vrot.lane.b32.xlu0 %v1020, 32
    %v1023 = vpop.permute.xlu0 %1022
    %s1025 = scalar_lea.vmem [#allocation3], 56
    %1026 = vst.msk [vmem:[%s1025] sm:$0xff] %vm188, %v1023
    %v1027 = vld [vmem:[#allocation3] sm:$0xff]
    %v1028 = vld [vmem:[#allocation3 + $0x8] sm:$0xff]
    %v1029 = vld [vmem:[#allocation3 + $0x10] sm:$0xff]
    %v1030 = vld [vmem:[#allocation3 + $0x18] sm:$0xff]
    %v1031 = vld [vmem:[#allocation3 + $0x20] sm:$0xff]
    %v1032 = vld [vmem:[#allocation3 + $0x28] sm:$0xff]
    %v1033 = vld [vmem:[#allocation3 + $0x30] sm:$0xff]
    %v1034 = vld [vmem:[#allocation3 + $0x38] sm:$0xff]
    %v1035 = vld [vmem:[%s4] sm:$0xff]
    %v1036 = vld [vmem:[%s4 + $0x8] sm:$0xff]
    %v1037 = vld [vmem:[%s4 + $0x10] sm:$0xff]
    %v1038 = vld [vmem:[%s4 + $0x18] sm:$0xff]
    %v1039 = vld [vmem:[%s5] sm:$0x1]
    %v1041 = vlaneseq
    %v1042 = vshrl.u32 %v1041, 7
    %v1043 = vsub.s32 0, %v1042
    %v1044 = vrot.slane %v1039, %v1043
    %v1047 = vsel %vm188, %v1027, 0
    %v1050 = vsel %vm188, %v1028, 0
    %v1053 = vsel %vm188, %v1029, 0
    %v1056 = vsel %vm188, %v1030, 0
    %v1059 = vsel %vm188, %v1031, 0
    %v1062 = vsel %vm188, %v1032, 0
    %v1065 = vsel %vm188, %v1033, 0
    %v1068 = vsel %vm188, %v1034, 0
    %1070 = vmatprep.subr.mxu0 0.0
    %1071 = vmatpush1.msra.mxu0 0.0
    %1072 = vmatprep.subr.mxu0 0.0
    %1073 = vmatpush1.msra.mxu0 0.0
    %1074 = vmatprep.subr.mxu0 0.0
    %1075 = vmatpush1.msra.mxu0 0.0
    %1076 = vmatprep.subr.mxu0 0.0
    %1077 = vmatpush1.msra.mxu0 0.0
    %1078 = vmatprep.subr.mxu0 0.0
    %1079 = vmatpush1.msra.mxu0 0.0
    %1080 = vmatprep.subr.mxu0 0.0
    %1081 = vmatpush1.msra.mxu0 0.0
    %1082 = vmatprep.subr.mxu0 0.0
    %1083 = vmatpush1.msra.mxu0 0.0
    %1084 = vmatprep.subr.mxu0 0.0
    %1085 = vmatpush1.msra.mxu0 0.0
    %1086 = vmatprep.subr.mxu0 0.0
    %1087 = vmatpush1.msra.mxu0 0.0
    %1088 = vmatprep.subr.mxu0 0.0
    %1089 = vmatpush1.msra.mxu0 0.0
    %1090 = vmatprep.subr.mxu0 0.0
    %1091 = vmatpush1.msra.mxu0 0.0
    %1092 = vmatprep.subr.mxu0 0.0
    %1093 = vmatpush1.msra.mxu0 0.0
    %1094 = vmatprep.subr.mxu0 0.0
    %1095 = vmatpush1.msra.mxu0 %v1038
    %1096 = vmatprep.subr.mxu0 0.0
    %1097 = vmatpush1.msra.mxu0 %v1037
    %1098 = vmatprep.subr.mxu0 0.0
    %1099 = vmatpush1.msra.mxu0 %v1036
    %1100 = vmatprep.subr.mxu0 0.0
    %1101 = vmatpush1.msra.mxu0 %v1035
    %1102 = vmatprep.subr.mxu0 0.0
    %1103 = vmatpush2.msra.mxu0 0.0
    %1104 = vmatprep.subr.mxu0 0.0
    %1105 = vmatpush2.msra.mxu0 0.0
    %1106 = vmatprep.subr.mxu0 0.0
    %1107 = vmatpush2.msra.mxu0 0.0
    %1108 = vmatprep.subr.mxu0 0.0
    %1109 = vmatpush2.msra.mxu0 0.0
    %1110 = vmatprep.subr.mxu0 0.0
    %1111 = vmatpush2.msra.mxu0 0.0
    %1112 = vmatprep.subr.mxu0 0.0
    %1113 = vmatpush2.msra.mxu0 0.0
    %1114 = vmatprep.subr.mxu0 0.0
    %1115 = vmatpush2.msra.mxu0 0.0
    %1116 = vmatprep.subr.mxu0 0.0
    %1117 = vmatpush2.msra.mxu0 0.0
    %1118 = vmatprep.subr.mxu0 0.0
    %1119 = vmatpush2.msra.mxu0 0.0
    %1120 = vmatprep.subr.mxu0 0.0
    %1121 = vmatpush2.msra.mxu0 0.0
    %1122 = vmatprep.subr.mxu0 0.0
    %1123 = vmatpush2.msra.mxu0 0.0
    %1124 = vmatprep.subr.mxu0 0.0
    %1125 = vmatpush2.msra.mxu0 0.0
    %1126 = vmatprep.subr.mxu0 0.0
    %1127 = vmatpush2.msra.mxu0 0.0
    %1128 = vmatprep.subr.mxu0 0.0
    %1129 = vmatpush2.msra.mxu0 0.0
    %1130 = vmatprep.subr.mxu0 0.0
    %1131 = vmatpush2.msra.mxu0 0.0
    %1132 = vmatprep.subr.mxu0 0.0
    %1133 = vmatpush2.msra.mxu0 0.0
    %1134 = vmatprep.mubr.f32.mxu0 0.0
    %1135 = vmatmul.mubr.f32.gmra.mxu0 %v1047
    %v1136 = vpop.f32.mrf.mxu0
    %v1137 = vadd.f32 %v1044, %v1136
    %v1138 = vpop.f32.mrf.mxu0
    %1139 = vmatprep.mubr.f32.mxu0 0.0
    %1140 = vmatmul.mubr.f32.gmra.mxu0 %v1050
    %v1141 = vpop.f32.mrf.mxu0
    %v1142 = vadd.f32 %v1044, %v1141
    %v1143 = vpop.f32.mrf.mxu0
    %1144 = vmatprep.mubr.f32.mxu0 0.0
    %1145 = vmatmul.mubr.f32.gmra.mxu0 %v1053
    %v1146 = vpop.f32.mrf.mxu0
    %v1147 = vadd.f32 %v1044, %v1146
    %v1148 = vpop.f32.mrf.mxu0
    %1149 = vmatprep.mubr.f32.mxu0 0.0
    %1150 = vmatmul.mubr.f32.gmra.mxu0 %v1056
    %v1151 = vpop.f32.mrf.mxu0
    %v1152 = vadd.f32 %v1044, %v1151
    %v1153 = vpop.f32.mrf.mxu0
    %1154 = vmatprep.mubr.f32.mxu0 0.0
    %1155 = vmatmul.mubr.f32.gmra.mxu0 %v1059
    %v1156 = vpop.f32.mrf.mxu0
    %v1157 = vadd.f32 %v1044, %v1156
    %v1158 = vpop.f32.mrf.mxu0
    %1159 = vmatprep.mubr.f32.mxu0 0.0
    %1160 = vmatmul.mubr.f32.gmra.mxu0 %v1062
    %v1161 = vpop.f32.mrf.mxu0
    %v1162 = vadd.f32 %v1044, %v1161
    %v1163 = vpop.f32.mrf.mxu0
    %1164 = vmatprep.mubr.f32.mxu0 0.0
    %1165 = vmatmul.mubr.f32.gmra.mxu0 %v1065
    %v1166 = vpop.f32.mrf.mxu0
    %v1167 = vadd.f32 %v1044, %v1166
    %v1168 = vpop.f32.mrf.mxu0
    %1169 = vmatprep.mubr.f32.mxu0 0.0
    %1170 = vmatmul.mubr.f32.gmra.mxu0 %v1068
    %v1171 = vpop.f32.mrf.mxu0
    %v1172 = vadd.f32 %v1044, %v1171
    %v1173 = vpop.f32.mrf.mxu0
    %1174 = vdwg.mxu0
    %1175 = vst [vmem:[#allocation4] sm:$0xff] %v1137
    %1176 = vst [vmem:[#allocation4 + $0x8] sm:$0xff] %v1142
    %1177 = vst [vmem:[#allocation4 + $0x10] sm:$0xff] %v1147
    %1178 = vst [vmem:[#allocation4 + $0x18] sm:$0xff] %v1152
    %1179 = vst [vmem:[#allocation4 + $0x20] sm:$0xff] %v1157
    %1180 = vst [vmem:[#allocation4 + $0x28] sm:$0xff] %v1162
    %1181 = vst [vmem:[#allocation4 + $0x30] sm:$0xff] %v1167
    %1182 = vst [vmem:[#allocation4 + $0x38] sm:$0xff] %v1172
    // Predicated region
    $region26: #{tpu_custom_call.1} parent=1 // pred_check
      _
    $region27: #{tpu_custom_call.1} parent=1 // pred_check_branch
      %1184 = sbr.rel (0) target = $region29
    $region28: #{tpu_custom_call.1} parent=1 // pred_region
      %s1186 = ssub.s32 1024, 1024
      %1187 = vsyncadd [#allocation5], %s1186
      %s1188 = sshll.u32 [#allocation4], 4
      %s1189 = int_to_ptr.vmem [resolvable:$true] %s1188
      %1194 = dma.vmem_to_hbm [thread:$0]  %s1189, 1024, %s6, [#allocation5], 128, 128, 8
    $region29: #{tpu_custom_call.1} parent=1 // pred_fallthru
      _
    // Predicated region
    $region30: #{tpu_custom_call.1} parent=1 // pred_check
      _
    $region31: #{tpu_custom_call.1} parent=1 // pred_check_branch
      %1196 = sbr.rel (0) target = $region33
    $region32: #{tpu_custom_call.1} parent=1 // pred_region
      %1197 = dma.done [#allocation5], 1024
    $region33: #{tpu_custom_call.1} parent=1 // pred_fallthru
      _
    %1198 = vsyncpa [#allocation5], 1

</llo_original>
